<compile_context>
chip_gen: v7x
topology: tpu7x:2x2x1
jax: 0.10.0
libtpu: 0.0.40
codegen_flags: <defaults>
</compile_context>

<pallas_src>
import functools

import jax
import jax.numpy as jnp
from jax.experimental import pallas as pl
from jax.experimental.pallas import tpu as pltpu


def autoencoder_kernel(
    x_ref,                  # (TB, D) input tile (row-major, contiguous in HBM)
    w1_ref, b1_ref,         # encoder L1: W1 (D, H), b1 (1, H)
    w2_ref, b2_ref,         # encoder L2: W2 (H, L), b2 (1, L)
    w3_ref, b3_ref,         # decoder L1: W3 (L, H), b3 (1, H)
    w4_ref, b4_ref,         # decoder L2: W4 (H, D), b4 (1, D)
    out_ref,                # (TB, D) output tile
    *, approx_sigmoid: bool,
):
    cdt = w1_ref.dtype      # MXU operand dtype (f32 or bf16); accumulate in f32

    def dense(a, w_ref, b_ref):
        return (jnp.dot(a.astype(cdt), w_ref[...],
                        preferred_element_type=jnp.float32)
                + b_ref[...])

    x = x_ref[...]
    h = jnp.maximum(dense(x, w1_ref, b1_ref), 0.0)       # encoder hidden (TB, H)
    z = dense(h, w2_ref, b2_ref)                          # latent code    (TB, L)
    d = jnp.maximum(dense(z, w3_ref, b3_ref), 0.0)        # decoder hidden (TB, H)
    y = dense(d, w4_ref, b4_ref)                          # logits         (TB, D)

    if approx_sigmoid:
        # EUP exp + approx reciprocal: keeps the denominator off the slow f32
        # divide path (worth most on v5e).  Only used on the low-precision path.
        s = pl.reciprocal(1.0 + jnp.exp(-y), approx=True)
    else:
        s = jax.nn.sigmoid(y)
    out_ref[...] = s.astype(out_ref.dtype)


def autoencoder_forward(x, params, *, tb=512, compute_dtype=None):
    """x: (B, D).  params: W stored (in, out), b stored (1, out) per layer."""
    B, D = x.shape
    w1, b1 = params["w1"], params["b1"]
    w2, b2 = params["w2"], params["b2"]
    w3, b3 = params["w3"], params["b3"]
    w4, b4 = params["w4"], params["b4"]
    assert w1.shape[0] == D and w4.shape[1] == D

    cdt = jnp.dtype(compute_dtype) if compute_dtype is not None else jnp.dtype(x.dtype)
    # Weight matrices are the MXU operands: cast them (tiny, one-time).  Biases
    # stay f32 (added to the f32 accumulator).  x stays in its HBM dtype and is
    # cast in-kernel, so no extra wrapper-side HBM pass is introduced.
    ws = tuple(w.astype(cdt) for w in (w1, w2, w3, w4))
    bs = tuple(b.astype(jnp.float32) for b in (b1, b2, b3, b4))
    weights = (ws[0], bs[0], ws[1], bs[1], ws[2], bs[2], ws[3], bs[3])

    # Batch tile: big enough to amortise per-step pipeline overhead, (8,128)-legal
    # (second-minor multiple of 8, or the full batch for tiny inputs).
    tb_eff = min(tb, B)
    if tb_eff % 8 != 0:
        tb_eff = B                         # single full-array block (always legal)
    num_tiles = pl.cdiv(B, tb_eff)         # ragged last tile -> Pallas edge masking

    def resident_spec(a):
        # Full-array block, constant index map -> DMA'd once, resident in VMEM.
        return pl.BlockSpec(a.shape, lambda i: (0, 0))

    itemsize = jnp.dtype(x.dtype).itemsize
    tile_bytes = tb_eff * D * itemsize
    weight_bytes = sum(int(a.size) * a.dtype.itemsize for a in weights)
    # in + out tiles double-buffered, resident weights also double-buffered by
    # default, plus compiler scratch headroom; capped at 32 MiB (safe everywhere).
    vmem_limit = int(min(max(4 * tile_bytes + 2 * weight_bytes + (2 << 20), 8 << 20),
                         32 << 20))

    H, L = w1.shape[1], w2.shape[1]
    flops = 2 * B * (D * H + H * L + L * H + H * D)
    transcendentals = B * D                                # sigmoid exp
    bytes_accessed = 2 * B * D * itemsize + weight_bytes

    kernel = functools.partial(autoencoder_kernel,
                               approx_sigmoid=(cdt != jnp.float32))

    out = pl.pallas_call(
        kernel,
        out_shape=jax.ShapeDtypeStruct((B, D), x.dtype),
        grid=(num_tiles,),
        in_specs=[pl.BlockSpec((tb_eff, D), lambda i: (i, 0))]
                + [resident_spec(a) for a in weights],
        out_specs=pl.BlockSpec((tb_eff, D), lambda i: (i, 0)),
        compiler_params=pltpu.CompilerParams(
            dimension_semantics=("parallel",),
            vmem_limit_bytes=vmem_limit,
        ),
        cost_estimate=pl.CostEstimate(
            flops=flops,
            transcendentals=transcendentals,
            bytes_accessed=bytes_accessed,
        ),
    )(x, *weights)
    return out


def init_params(key, d_in, hidden, latent):
    """PyTorch-nn.Linear-style init values, stored kernel-ready: W (in, out), b (1, out)."""
    def linear(key, fan_in, fan_out):
        kw, kb = jax.random.split(key)
        bound = float(fan_in) ** -0.5
        w = jax.random.uniform(kw, (fan_in, fan_out), jnp.float32, -bound, bound)
        b = jax.random.uniform(kb, (1, fan_out), jnp.float32, -bound, bound)
        return w, b

    k1, k2, k3, k4 = jax.random.split(key, 4)
    w1, b1 = linear(k1, d_in, hidden)     # encoder L1
    w2, b2 = linear(k2, hidden, latent)   # encoder L2
    w3, b3 = linear(k3, latent, hidden)   # decoder L1
    w4, b4 = linear(k4, hidden, d_in)     # decoder L2
    return dict(w1=w1, b1=b1, w2=w2, b2=b2, w3=w3, b3=b3, w4=w4, b4=b4)


def reference_forward(x, p):
    """Pure-JAX reference in (batch, features) layout (== the PyTorch forward)."""
    mm = lambda a, b: jnp.dot(a, b, precision=jax.lax.Precision.HIGHEST)
    h = jnp.maximum(mm(x, p["w1"]) + p["b1"], 0.0)
    z = mm(h, p["w2"]) + p["b2"]
    d = jnp.maximum(mm(z, p["w3"]) + p["b3"], 0.0)
    return jax.nn.sigmoid(mm(d, p["w4"]) + p["b4"])


if __name__ == "__main__":
    # Small demo shapes: D=64 features, H=32 hidden, L=16 latent, batch=1024
    # -> 2 grid steps of the default tb=512 (grid exercised; even step count so
    # both v7x TensorCores get work; single TC on v5e/v6e just iterates).
    B, D, H, L = 1024, 64, 32, 16

    key = jax.random.PRNGKey(0)
    k_x, k_p = jax.random.split(key)
    x = jax.random.normal(k_x, (B, D), jnp.float32)
    params = init_params(k_p, D, H, L)

    ref = reference_forward(x, params)

    # f32 path: tight correctness check.
    out = jax.block_until_ready(autoencoder_forward(x, params))
    assert out.shape == (B, D)
    assert jnp.allclose(out, ref, atol=2e-5, rtol=2e-5), "f32 kernel mismatch"

    # bf16-operand path (MXU-native ingest, f32 accumulation): looser tolerance.
    out_bf16 = jax.block_until_ready(
        autoencoder_forward(x, params, compute_dtype=jnp.bfloat16))
    assert jnp.allclose(out_bf16, ref, atol=3e-2), "bf16 kernel mismatch"

    print("KERNEL_OK")
</pallas_src>

<mosaic_0001>
module attributes {stable_mosaic.version = 11 : i64} {
  func.func @autoencoder_kernel(%arg0: i32, %arg1: memref<512x64xf32, #tpu.memory_space<vmem>>, %arg2: memref<64x32xf32, #tpu.memory_space<vmem>>, %arg3: memref<1x32xf32, #tpu.memory_space<vmem>>, %arg4: memref<32x16xf32, #tpu.memory_space<vmem>>, %arg5: memref<1x16xf32, #tpu.memory_space<vmem>>, %arg6: memref<16x32xf32, #tpu.memory_space<vmem>>, %arg7: memref<1x32xf32, #tpu.memory_space<vmem>>, %arg8: memref<32x64xf32, #tpu.memory_space<vmem>>, %arg9: memref<1x64xf32, #tpu.memory_space<vmem>>, %arg10: memref<512x64xf32, #tpu.memory_space<vmem>>) attributes {dimension_semantics = [#tpu.dimension_semantics<parallel>], iteration_bounds = array<i64: 2>, scalar_prefetch = 0 : i64, scratch_operands = 0 : i64, tpu.core_type = #tpu.core_type<tc>, window_params = [{transform_indices = @transform_0, window_bounds = array<i64: 512, 64>}, {pipeline_mode = #tpu.pipeline_mode<synchronous>, transform_indices = @transform_1, window_bounds = array<i64: 64, 32>}, {pipeline_mode = #tpu.pipeline_mode<synchronous>, transform_indices = @transform_2, window_bounds = array<i64: 1, 32>}, {pipeline_mode = #tpu.pipeline_mode<synchronous>, transform_indices = @transform_3, window_bounds = array<i64: 32, 16>}, {pipeline_mode = #tpu.pipeline_mode<synchronous>, transform_indices = @transform_4, window_bounds = array<i64: 1, 16>}, {pipeline_mode = #tpu.pipeline_mode<synchronous>, transform_indices = @transform_5, window_bounds = array<i64: 16, 32>}, {pipeline_mode = #tpu.pipeline_mode<synchronous>, transform_indices = @transform_6, window_bounds = array<i64: 1, 32>}, {pipeline_mode = #tpu.pipeline_mode<synchronous>, transform_indices = @transform_7, window_bounds = array<i64: 32, 64>}, {pipeline_mode = #tpu.pipeline_mode<synchronous>, transform_indices = @transform_8, window_bounds = array<i64: 1, 64>}, {transform_indices = @transform_9, window_bounds = array<i64: 512, 64>}]} {
    %c0 = arith.constant 0 : index
    %c0_0 = arith.constant 0 : index
    %0 = vector.load %arg1[%c0, %c0_0] : memref<512x64xf32, #tpu.memory_space<vmem>>, vector<512x64xf32>
    %c0_1 = arith.constant 0 : index
    %c0_2 = arith.constant 0 : index
    %1 = vector.load %arg2[%c0_1, %c0_2] : memref<64x32xf32, #tpu.memory_space<vmem>>, vector<64x32xf32>
    %cst = arith.constant dense<0.000000e+00> : vector<512x32xf32>
    %2 = tpu.matmul %0, %1, %cst {dimension_numbers = #tpu.dot_dimension_numbers<[1], [0], [0], [1], [0, 0, 1, 1], [], []>} : vector<512x64xf32>, vector<64x32xf32>, vector<512x32xf32> -> vector<512x32xf32>
    %c0_3 = arith.constant 0 : index
    %c0_4 = arith.constant 0 : index
    %3 = vector.load %arg3[%c0_3, %c0_4] : memref<1x32xf32, #tpu.memory_space<vmem>>, vector<1x32xf32>
    %4 = vector.broadcast %3 : vector<1x32xf32> to vector<512x32xf32>
    %5 = arith.addf %2, %4 : vector<512x32xf32>
    %cst_5 = arith.constant 0.000000e+00 : f32
    %6 = vector.broadcast %cst_5 : f32 to vector<512x32xf32>
    %7 = arith.maximumf %5, %6 : vector<512x32xf32>
    %c0_6 = arith.constant 0 : index
    %c0_7 = arith.constant 0 : index
    %8 = vector.load %arg4[%c0_6, %c0_7] : memref<32x16xf32, #tpu.memory_space<vmem>>, vector<32x16xf32>
    %cst_8 = arith.constant dense<0.000000e+00> : vector<512x16xf32>
    %9 = tpu.matmul %7, %8, %cst_8 {dimension_numbers = #tpu.dot_dimension_numbers<[1], [0], [0], [1], [0, 0, 1, 1], [], []>} : vector<512x32xf32>, vector<32x16xf32>, vector<512x16xf32> -> vector<512x16xf32>
    %c0_9 = arith.constant 0 : index
    %c0_10 = arith.constant 0 : index
    %10 = vector.load %arg5[%c0_9, %c0_10] : memref<1x16xf32, #tpu.memory_space<vmem>>, vector<1x16xf32>
    %11 = vector.broadcast %10 : vector<1x16xf32> to vector<512x16xf32>
    %12 = arith.addf %9, %11 : vector<512x16xf32>
    %c0_11 = arith.constant 0 : index
    %c0_12 = arith.constant 0 : index
    %13 = vector.load %arg6[%c0_11, %c0_12] : memref<16x32xf32, #tpu.memory_space<vmem>>, vector<16x32xf32>
    %cst_13 = arith.constant dense<0.000000e+00> : vector<512x32xf32>
    %14 = tpu.matmul %12, %13, %cst_13 {dimension_numbers = #tpu.dot_dimension_numbers<[1], [0], [0], [1], [0, 0, 1, 1], [], []>} : vector<512x16xf32>, vector<16x32xf32>, vector<512x32xf32> -> vector<512x32xf32>
    %c0_14 = arith.constant 0 : index
    %c0_15 = arith.constant 0 : index
    %15 = vector.load %arg7[%c0_14, %c0_15] : memref<1x32xf32, #tpu.memory_space<vmem>>, vector<1x32xf32>
    %16 = vector.broadcast %15 : vector<1x32xf32> to vector<512x32xf32>
    %17 = arith.addf %14, %16 : vector<512x32xf32>
    %cst_16 = arith.constant 0.000000e+00 : f32
    %18 = vector.broadcast %cst_16 : f32 to vector<512x32xf32>
    %19 = arith.maximumf %17, %18 : vector<512x32xf32>
    %c0_17 = arith.constant 0 : index
    %c0_18 = arith.constant 0 : index
    %20 = vector.load %arg8[%c0_17, %c0_18] : memref<32x64xf32, #tpu.memory_space<vmem>>, vector<32x64xf32>
    %cst_19 = arith.constant dense<0.000000e+00> : vector<512x64xf32>
    %21 = tpu.matmul %19, %20, %cst_19 {dimension_numbers = #tpu.dot_dimension_numbers<[1], [0], [0], [1], [0, 0, 1, 1], [], []>} : vector<512x32xf32>, vector<32x64xf32>, vector<512x64xf32> -> vector<512x64xf32>
    %c0_20 = arith.constant 0 : index
    %c0_21 = arith.constant 0 : index
    %22 = vector.load %arg9[%c0_20, %c0_21] : memref<1x64xf32, #tpu.memory_space<vmem>>, vector<1x64xf32>
    %23 = vector.broadcast %22 : vector<1x64xf32> to vector<512x64xf32>
    %24 = arith.addf %21, %23 : vector<512x64xf32>
    %25 = arith.negf %24 : vector<512x64xf32>
    %26 = math.exp %25 : vector<512x64xf32>
    %cst_22 = arith.constant 1.000000e+00 : f32
    %27 = vector.broadcast %cst_22 : f32 to vector<512x64xf32>
    %28 = arith.addf %27, %26 : vector<512x64xf32>
    %29 = arith.divf %27, %28 : vector<512x64xf32>
    %c0_23 = arith.constant 0 : index
    %c0_24 = arith.constant 0 : index
    %30 = vector.load %arg10[%c0_23, %c0_24] : memref<512x64xf32, #tpu.memory_space<vmem>>, vector<512x64xf32>
    tpu.vector_store %arg10[%c0_23, %c0_24], %29 {strides = array<i32>} : memref<512x64xf32, #tpu.memory_space<vmem>>, vector<512x64xf32>,
    return
  }
  func.func @transform_0(%arg0: i32) -> (i32, i32) {
    %c0_i32 = arith.constant 0 : i32
    %c0_i32_0 = arith.constant 0 : i32
    return %arg0, %c0_i32 : i32, i32
  }
  func.func @transform_1(%arg0: i32) -> (i32, i32) {
    %c0_i32 = arith.constant 0 : i32
    %c0_i32_0 = arith.constant 0 : i32
    %c0_i32_1 = arith.constant 0 : i32
    return %c0_i32, %c0_i32_0 : i32, i32
  }
  func.func @transform_2(%arg0: i32) -> (i32, i32) {
    %c0_i32 = arith.constant 0 : i32
    %c0_i32_0 = arith.constant 0 : i32
    %c0_i32_1 = arith.constant 0 : i32
    return %c0_i32, %c0_i32_0 : i32, i32
  }
  func.func @transform_3(%arg0: i32) -> (i32, i32) {
    %c0_i32 = arith.constant 0 : i32
    %c0_i32_0 = arith.constant 0 : i32
    %c0_i32_1 = arith.constant 0 : i32
    return %c0_i32, %c0_i32_0 : i32, i32
  }
  func.func @transform_4(%arg0: i32) -> (i32, i32) {
    %c0_i32 = arith.constant 0 : i32
    %c0_i32_0 = arith.constant 0 : i32
    %c0_i32_1 = arith.constant 0 : i32
    return %c0_i32, %c0_i32_0 : i32, i32
  }
  func.func @transform_5(%arg0: i32) -> (i32, i32) {
    %c0_i32 = arith.constant 0 : i32
    %c0_i32_0 = arith.constant 0 : i32
    %c0_i32_1 = arith.constant 0 : i32
    return %c0_i32, %c0_i32_0 : i32, i32
  }
  func.func @transform_6(%arg0: i32) -> (i32, i32) {
    %c0_i32 = arith.constant 0 : i32
    %c0_i32_0 = arith.constant 0 : i32
    %c0_i32_1 = arith.constant 0 : i32
    return %c0_i32, %c0_i32_0 : i32, i32
  }
  func.func @transform_7(%arg0: i32) -> (i32, i32) {
    %c0_i32 = arith.constant 0 : i32
    %c0_i32_0 = arith.constant 0 : i32
    %c0_i32_1 = arith.constant 0 : i32
    return %c0_i32, %c0_i32_0 : i32, i32
  }
  func.func @transform_8(%arg0: i32) -> (i32, i32) {
    %c0_i32 = arith.constant 0 : i32
    %c0_i32_0 = arith.constant 0 : i32
    %c0_i32_1 = arith.constant 0 : i32
    return %c0_i32, %c0_i32_0 : i32, i32
  }
  func.func @transform_9(%arg0: i32) -> (i32, i32) {
    %c0_i32 = arith.constant 0 : i32
    %c0_i32_0 = arith.constant 0 : i32
    return %arg0, %c0_i32 : i32, i32
  }
}

</mosaic_0001>

<llo_original>
// kernel: tpu_custom_call.1
$region0: #{tpu_custom_call.1}
  #allocation0 [shape = 'u32[]', space=smem, size = 0x4, offset = 0x4, fixed_abs, tag = 'smem constant byte address 0x4 - core index']
  #allocation1 [shape = 'u32[144,128]{1,0:T(1,128)}', space=vmem, size = 0x12000, scoped, tag = 'internal scratch']
  %s0 = inlined_call_operand.vmem [shape: f32[1024,64], index: 0, kind: input, shape index: {}]
  %s1 = inlined_call_operand.vmem [shape: f32[64,32], index: 1, kind: input, shape index: {}]
  %s2 = inlined_call_operand.vmem [shape: f32[1,32], index: 2, kind: input, shape index: {}]
  %s3 = inlined_call_operand.vmem [shape: f32[32,16], index: 3, kind: input, shape index: {}]
  %s4 = inlined_call_operand.vmem [shape: f32[1,16], index: 4, kind: input, shape index: {}]
  %s5 = inlined_call_operand.vmem [shape: f32[16,32], index: 5, kind: input, shape index: {}]
  %s6 = inlined_call_operand.vmem [shape: f32[1,32], index: 6, kind: input, shape index: {}]
  %s7 = inlined_call_operand.vmem [shape: f32[32,64], index: 7, kind: input, shape index: {}]
  %s8 = inlined_call_operand.vmem [shape: f32[1,64], index: 8, kind: input, shape index: {}]
  %s9 = inlined_call_operand.vmem [shape: f32[1024,64], index: 9, kind: output, shape index: {}]
  %s10 = sld [smem:[#allocation0]]
  $region69: #{tpu_custom_call.1} parent=0
    _
  %s12 = ssub.s32 1, %s10
  %s13 = scalar_select 0, %s12, %s10
  loop: start=0, step=1, limit=4
  $region2: #{tpu_custom_call.1} parent=0 // loop_pre_header
    _
  $region3: #{tpu_custom_call.1} parent=0 // loop_header
    %s15 = sphi 0, %s19
    %p16 = scmp.ge.s32.totalorder %s15, 4
    %s25 = sphi 0, %s27
    %s28 = sphi 0, %s25
    %s29 = sphi 0, %s28
    %s45 = sphi 0, %s29
    %s49 = sphi 0, %s49
    %s51 = sphi 0, %s49
    %s52 = sphi 0, %s51
    %s66 = sphi 0, %s52
    %s70 = sphi 0, %s70
    %s72 = sphi 0, %s70
    %s73 = sphi 0, %s72
    %s87 = sphi 0, %s73
    %s91 = sphi 0, %s91
    %s93 = sphi 0, %s91
    %s94 = sphi 0, %s93
    %s108 = sphi 0, %s94
    %s112 = sphi 0, %s112
    %s114 = sphi 0, %s112
    %s115 = sphi 0, %s114
    %s129 = sphi 0, %s115
    %s133 = sphi 0, %s133
    %s135 = sphi 0, %s133
    %s136 = sphi 0, %s135
    %s150 = sphi 0, %s136
    %s154 = sphi 0, %s154
    %s156 = sphi 0, %s154
    %s157 = sphi 0, %s156
    %s171 = sphi 0, %s157
    %s175 = sphi 0, %s175
    %s177 = sphi 0, %s175
    %s178 = sphi 0, %s177
    %s192 = sphi 0, %s178
    %s196 = sphi 0, %s196
    %s198 = sphi 0, %s196
    %s199 = sphi 0, %s198
    %s213 = sphi 0, %s199
    %s219 = sphi 0, %s221
    %s222 = sphi 0, %s219
    %s223 = sphi 0, %s222
    %s239 = sphi 0, %s223
  $region4: #{tpu_custom_call.1} parent=0 // loop_header_branch
    %18 = sbr.rel (%p16) target = $region8
  $region5: #{tpu_custom_call.1} parent=0 // loop_body
    %s20 = ssub.s32 %s15, 1
    %s21 = ssub.s32 %s15, 2
    %s22 = sadd.s32 %s15, 1
    %s23 = ssub.s32 %s15, %s22
    %p24 = scmp.eq.s32.totalorder %s23, 0
    %s26 = sadd.s32 %s25, 1
    %s27 = scalar_select %p24, %s25, %s26
    %p30 = pneg %p24
    %p31 = scmp.eq.s32.totalorder %s15, 1
    %p32 = por %p30, %p31
    %p33 = scmp.ne.s32.totalorder %s25, %s28
    %p34 = scmp.eq.s32.totalorder %s15, 0
    %p35 = por %p33, %p34
    %p36 = scmp.ne.s32.totalorder %s25, %s28
    %p37 = scmp.eq.s32.totalorder %s20, 1
    %p38 = por %p36, %p37
    %p39 = scmp.ne.s32.totalorder %s28, %s29
    %p40 = scmp.eq.s32.totalorder %s20, 0
    %p41 = por %p39, %p40
    %p42 = scmp.ne.s32.totalorder %s28, %s29
    %p43 = scmp.eq.s32.totalorder %s21, 1
    %p44 = por %p42, %p43
    %p46 = scmp.ne.s32.totalorder %s29, %s45
    %p47 = scmp.eq.s32.totalorder %s21, 0
    %p48 = por %p46, %p47
    %s50 = sadd.s32 %s49, 1
    %p53 = scmp.eq.s32.totalorder %s15, 1
    %p54 = scmp.ne.s32.totalorder %s49, %s51
    %p55 = scmp.eq.s32.totalorder %s15, 0
    %p56 = por %p54, %p55
    %p57 = scmp.ne.s32.totalorder %s49, %s51
    %p58 = scmp.eq.s32.totalorder %s20, 1
    %p59 = por %p57, %p58
    %p60 = scmp.ne.s32.totalorder %s51, %s52
    %p61 = scmp.eq.s32.totalorder %s20, 0
    %p62 = por %p60, %p61
    %p63 = scmp.ne.s32.totalorder %s51, %s52
    %p64 = scmp.eq.s32.totalorder %s21, 1
    %p65 = por %p63, %p64
    %p67 = scmp.ne.s32.totalorder %s52, %s66
    %p68 = scmp.eq.s32.totalorder %s21, 0
    %p69 = por %p67, %p68
    %s71 = sadd.s32 %s70, 1
    %p74 = scmp.eq.s32.totalorder %s15, 1
    %p75 = scmp.ne.s32.totalorder %s70, %s72
    %p76 = scmp.eq.s32.totalorder %s15, 0
    %p77 = por %p75, %p76
    %p78 = scmp.ne.s32.totalorder %s70, %s72
    %p79 = scmp.eq.s32.totalorder %s20, 1
    %p80 = por %p78, %p79
    %p81 = scmp.ne.s32.totalorder %s72, %s73
    %p82 = scmp.eq.s32.totalorder %s20, 0
    %p83 = por %p81, %p82
    %p84 = scmp.ne.s32.totalorder %s72, %s73
    %p85 = scmp.eq.s32.totalorder %s21, 1
    %p86 = por %p84, %p85
    %p88 = scmp.ne.s32.totalorder %s73, %s87
    %p89 = scmp.eq.s32.totalorder %s21, 0
    %p90 = por %p88, %p89
    %s92 = sadd.s32 %s91, 1
    %p95 = scmp.eq.s32.totalorder %s15, 1
    %p96 = scmp.ne.s32.totalorder %s91, %s93
    %p97 = scmp.eq.s32.totalorder %s15, 0
    %p98 = por %p96, %p97
    %p99 = scmp.ne.s32.totalorder %s91, %s93
    %p100 = scmp.eq.s32.totalorder %s20, 1
    %p101 = por %p99, %p100
    %p102 = scmp.ne.s32.totalorder %s93, %s94
    %p103 = scmp.eq.s32.totalorder %s20, 0
    %p104 = por %p102, %p103
    %p105 = scmp.ne.s32.totalorder %s93, %s94
    %p106 = scmp.eq.s32.totalorder %s21, 1
    %p107 = por %p105, %p106
    %p109 = scmp.ne.s32.totalorder %s94, %s108
    %p110 = scmp.eq.s32.totalorder %s21, 0
    %p111 = por %p109, %p110
    %s113 = sadd.s32 %s112, 1
    %p116 = scmp.eq.s32.totalorder %s15, 1
    %p117 = scmp.ne.s32.totalorder %s112, %s114
    %p118 = scmp.eq.s32.totalorder %s15, 0
    %p119 = por %p117, %p118
    %p120 = scmp.ne.s32.totalorder %s112, %s114
    %p121 = scmp.eq.s32.totalorder %s20, 1
    %p122 = por %p120, %p121
    %p123 = scmp.ne.s32.totalorder %s114, %s115
    %p124 = scmp.eq.s32.totalorder %s20, 0
    %p125 = por %p123, %p124
    %p126 = scmp.ne.s32.totalorder %s114, %s115
    %p127 = scmp.eq.s32.totalorder %s21, 1
    %p128 = por %p126, %p127
    %p130 = scmp.ne.s32.totalorder %s115, %s129
    %p131 = scmp.eq.s32.totalorder %s21, 0
    %p132 = por %p130, %p131
    %s134 = sadd.s32 %s133, 1
    %p137 = scmp.eq.s32.totalorder %s15, 1
    %p138 = scmp.ne.s32.totalorder %s133, %s135
    %p139 = scmp.eq.s32.totalorder %s15, 0
    %p140 = por %p138, %p139
    %p141 = scmp.ne.s32.totalorder %s133, %s135
    %p142 = scmp.eq.s32.totalorder %s20, 1
    %p143 = por %p141, %p142
    %p144 = scmp.ne.s32.totalorder %s135, %s136
    %p145 = scmp.eq.s32.totalorder %s20, 0
    %p146 = por %p144, %p145
    %p147 = scmp.ne.s32.totalorder %s135, %s136
    %p148 = scmp.eq.s32.totalorder %s21, 1
    %p149 = por %p147, %p148
    %p151 = scmp.ne.s32.totalorder %s136, %s150
    %p152 = scmp.eq.s32.totalorder %s21, 0
    %p153 = por %p151, %p152
    %s155 = sadd.s32 %s154, 1
    %p158 = scmp.eq.s32.totalorder %s15, 1
    %p159 = scmp.ne.s32.totalorder %s154, %s156
    %p160 = scmp.eq.s32.totalorder %s15, 0
    %p161 = por %p159, %p160
    %p162 = scmp.ne.s32.totalorder %s154, %s156
    %p163 = scmp.eq.s32.totalorder %s20, 1
    %p164 = por %p162, %p163
    %p165 = scmp.ne.s32.totalorder %s156, %s157
    %p166 = scmp.eq.s32.totalorder %s20, 0
    %p167 = por %p165, %p166
    %p168 = scmp.ne.s32.totalorder %s156, %s157
    %p169 = scmp.eq.s32.totalorder %s21, 1
    %p170 = por %p168, %p169
    %p172 = scmp.ne.s32.totalorder %s157, %s171
    %p173 = scmp.eq.s32.totalorder %s21, 0
    %p174 = por %p172, %p173
    %s176 = sadd.s32 %s175, 1
    %p179 = scmp.eq.s32.totalorder %s15, 1
    %p180 = scmp.ne.s32.totalorder %s175, %s177
    %p181 = scmp.eq.s32.totalorder %s15, 0
    %p182 = por %p180, %p181
    %p183 = scmp.ne.s32.totalorder %s175, %s177
    %p184 = scmp.eq.s32.totalorder %s20, 1
    %p185 = por %p183, %p184
    %p186 = scmp.ne.s32.totalorder %s177, %s178
    %p187 = scmp.eq.s32.totalorder %s20, 0
    %p188 = por %p186, %p187
    %p189 = scmp.ne.s32.totalorder %s177, %s178
    %p190 = scmp.eq.s32.totalorder %s21, 1
    %p191 = por %p189, %p190
    %p193 = scmp.ne.s32.totalorder %s178, %s192
    %p194 = scmp.eq.s32.totalorder %s21, 0
    %p195 = por %p193, %p194
    %s197 = sadd.s32 %s196, 1
    %p200 = scmp.eq.s32.totalorder %s15, 1
    %p201 = scmp.ne.s32.totalorder %s196, %s198
    %p202 = scmp.eq.s32.totalorder %s15, 0
    %p203 = por %p201, %p202
    %p204 = scmp.ne.s32.totalorder %s196, %s198
    %p205 = scmp.eq.s32.totalorder %s20, 1
    %p206 = por %p204, %p205
    %p207 = scmp.ne.s32.totalorder %s198, %s199
    %p208 = scmp.eq.s32.totalorder %s20, 0
    %p209 = por %p207, %p208
    %p210 = scmp.ne.s32.totalorder %s198, %s199
    %p211 = scmp.eq.s32.totalorder %s21, 1
    %p212 = por %p210, %p211
    %p214 = scmp.ne.s32.totalorder %s199, %s213
    %p215 = scmp.eq.s32.totalorder %s21, 0
    %p216 = por %p214, %p215
    %s217 = ssub.s32 %s15, %s22
    %p218 = scmp.eq.s32.totalorder %s217, 0
    %s220 = sadd.s32 %s219, 1
    %s221 = scalar_select %p218, %s219, %s220
    %p224 = pneg %p218
    %p225 = scmp.eq.s32.totalorder %s15, 1
    %p226 = por %p224, %p225
    %p227 = scmp.ne.s32.totalorder %s219, %s222
    %p228 = scmp.eq.s32.totalorder %s15, 0
    %p229 = por %p227, %p228
    %p230 = scmp.ne.s32.totalorder %s219, %s222
    %p231 = scmp.eq.s32.totalorder %s20, 1
    %p232 = por %p230, %p231
    %p233 = scmp.ne.s32.totalorder %s222, %s223
    %p234 = scmp.eq.s32.totalorder %s20, 0
    %p235 = por %p233, %p234
    %p236 = scmp.ne.s32.totalorder %s222, %s223
    %p237 = scmp.eq.s32.totalorder %s21, 1
    %p238 = por %p236, %p237
    %p240 = scmp.ne.s32.totalorder %s223, %s239
    %p241 = scmp.eq.s32.totalorder %s21, 0
    %p242 = por %p240, %p241
    %p243 = scmp.le.s32.totalorder 1, %s15
    %p244 = scmp.lt.s32.totalorder %s15, 3
    %p245 = pnand %p243, %p244
    %p246 = pneg %p245
    // Predicated region
    $region9: #{tpu_custom_call.1} parent=5 // pred_check
      _
    $region10: #{tpu_custom_call.1} parent=5 // pred_check_branch
      %248 = sbr.rel (%p245) target = $region12
    $region11: #{tpu_custom_call.1} parent=5 // pred_region
      %s249 = ssub.s32 %s15, 1
      // Predicated region
      $region13: #{tpu_custom_call.1} parent=11 // pred_check
        %p250 = pneg %p62
      $region14: #{tpu_custom_call.1} parent=11 // pred_check_branch
        %252 = sbr.rel (%p250) target = $region16
      $region15: #{tpu_custom_call.1} parent=11 // pred_region
        _
      $region16: #{tpu_custom_call.1} parent=11 // pred_fallthru
        _
      // Predicated region
      $region17: #{tpu_custom_call.1} parent=11 // pred_check
        %p253 = pneg %p83
      $region18: #{tpu_custom_call.1} parent=11 // pred_check_branch
        %255 = sbr.rel (%p253) target = $region20
      $region19: #{tpu_custom_call.1} parent=11 // pred_region
        _
      $region20: #{tpu_custom_call.1} parent=11 // pred_fallthru
        _
      // Predicated region
      $region21: #{tpu_custom_call.1} parent=11 // pred_check
        %p256 = pneg %p104
      $region22: #{tpu_custom_call.1} parent=11 // pred_check_branch
        %258 = sbr.rel (%p256) target = $region24
      $region23: #{tpu_custom_call.1} parent=11 // pred_region
        _
      $region24: #{tpu_custom_call.1} parent=11 // pred_fallthru
        _
      // Predicated region
      $region25: #{tpu_custom_call.1} parent=11 // pred_check
        %p259 = pneg %p125
      $region26: #{tpu_custom_call.1} parent=11 // pred_check_branch
        %261 = sbr.rel (%p259) target = $region28
      $region27: #{tpu_custom_call.1} parent=11 // pred_region
        _
      $region28: #{tpu_custom_call.1} parent=11 // pred_fallthru
        _
      // Predicated region
      $region29: #{tpu_custom_call.1} parent=11 // pred_check
        %p262 = pneg %p146
      $region30: #{tpu_custom_call.1} parent=11 // pred_check_branch
        %264 = sbr.rel (%p262) target = $region32
      $region31: #{tpu_custom_call.1} parent=11 // pred_region
        _
      $region32: #{tpu_custom_call.1} parent=11 // pred_fallthru
        _
      // Predicated region
      $region33: #{tpu_custom_call.1} parent=11 // pred_check
        %p265 = pneg %p167
      $region34: #{tpu_custom_call.1} parent=11 // pred_check_branch
        %267 = sbr.rel (%p265) target = $region36
      $region35: #{tpu_custom_call.1} parent=11 // pred_region
        _
      $region36: #{tpu_custom_call.1} parent=11 // pred_fallthru
        _
      // Predicated region
      $region37: #{tpu_custom_call.1} parent=11 // pred_check
        %p268 = pneg %p188
      $region38: #{tpu_custom_call.1} parent=11 // pred_check_branch
        %270 = sbr.rel (%p268) target = $region40
      $region39: #{tpu_custom_call.1} parent=11 // pred_region
        _
      $region40: #{tpu_custom_call.1} parent=11 // pred_fallthru
        _
      // Predicated region
      $region41: #{tpu_custom_call.1} parent=11 // pred_check
        %p271 = pneg %p209
      $region42: #{tpu_custom_call.1} parent=11 // pred_check_branch
        %273 = sbr.rel (%p271) target = $region44
      $region43: #{tpu_custom_call.1} parent=11 // pred_region
        _
      $region44: #{tpu_custom_call.1} parent=11 // pred_fallthru
        _
    $region12: #{tpu_custom_call.1} parent=5 // pred_fallthru
      _
    %p274 = scmp.lt.s32.totalorder %s15, 2
    // Predicated region
    $region45: #{tpu_custom_call.1} parent=5 // pred_check
      %p275 = pneg %p274
    $region46: #{tpu_custom_call.1} parent=5 // pred_check_branch
      %277 = sbr.rel (%p275) target = $region48
    $region47: #{tpu_custom_call.1} parent=5 // pred_region
      // Predicated region
      $region49: #{tpu_custom_call.1} parent=47 // pred_check
        %p278 = pneg %p35
      $region50: #{tpu_custom_call.1} parent=47 // pred_check_branch
        %280 = sbr.rel (%p278) target = $region52
      $region51: #{tpu_custom_call.1} parent=47 // pred_region
        %s281 = smul.u32 64, %s15
        %p282 = scmp.lt.s32.totalorder %s281, 127
        %s283 = scalar_select %p282, %s281, 127
        %s284 = smul.addr %s283, 8
        %s285 = scalar_lea.vmem %s0, %s284
        %s286 = smul.u32 64, %s15
      $region52: #{tpu_custom_call.1} parent=47 // pred_fallthru
        _
    $region48: #{tpu_custom_call.1} parent=5 // pred_fallthru
      _
    %p287 = scmp.le.s32.totalorder 1, %s15
    %p288 = scmp.lt.s32.totalorder %s15, 3
    %p289 = pnand %p287, %p288
    %p290 = pneg %p289
    // Predicated region
    $region53: #{tpu_custom_call.1} parent=5 // pred_check
      _
    $region54: #{tpu_custom_call.1} parent=5 // pred_check_branch
      %292 = sbr.rel (%p289) target = $region56
    $region55: #{tpu_custom_call.1} parent=5 // pred_region
      %s293 = ssub.s32 %s15, 1
      %s294 = smul.u32 64, %s20
      %p295 = scmp.lt.s32.totalorder %s294, 127
      %s296 = scalar_select %p295, %s294, 127
      %s297 = smul.addr %s296, 8
      %s298 = scalar_lea.vmem %s0, %s297
      %p299 = pneg %p41
      %p300 = pneg %p38
      %p301 = pneg %p62
      %p302 = pneg %p59
      %p303 = pneg %p83
      %p304 = pneg %p80
      %p305 = pneg %p104
      %p306 = pneg %p101
      %p307 = pneg %p125
      %p308 = pneg %p122
      %p309 = pneg %p146
      %p310 = pneg %p143
      %p311 = pneg %p167
      %p312 = pneg %p164
      %p313 = pneg %p188
      %p314 = pneg %p185
      %p315 = pneg %p209
      %p316 = pneg %p206
      %p317 = pneg %p235
      %p318 = pneg %p232
      %s319 = smul.u32 64, %s20
      %p320 = scmp.lt.s32.totalorder %s319, 127
      %s321 = scalar_select %p320, %s319, 127
      %s322 = smul.addr %s321, 8
      %s323 = scalar_lea.vmem %s9, %s322
      %s324 = smul.u32 64, %s20
      %p325 = scmp.lt.s32.totalorder %s324, 127
      %s326 = scalar_select %p325, %s324, 127
      %s327 = smul.addr %s326, 8
      %s328 = scalar_lea.vmem %s0, %s327
      %s329 = smul.u32 64, %s20
      %s330 = smul.u32 64, %s20
      %p331 = scmp.lt.s32.totalorder %s330, 127
      %s332 = scalar_select %p331, %s330, 127
      %s333 = smul.addr %s332, 8
      %s334 = scalar_lea.vmem %s9, %s333
      %s335 = smul.u32 64, %s20
      %v336 = vld [vmem:[%s328] sm:$0xff]
      %v337 = vld [vmem:[%s328 + $0x8] sm:$0xff]
      %v338 = vld [vmem:[%s328 + $0x10] sm:$0xff]
      %v339 = vld [vmem:[%s328 + $0x18] sm:$0xff]
      %v340 = vld [vmem:[%s328 + $0x20] sm:$0xff]
      %v341 = vld [vmem:[%s328 + $0x28] sm:$0xff]
      %v342 = vld [vmem:[%s328 + $0x30] sm:$0xff]
      %v343 = vld [vmem:[%s328 + $0x38] sm:$0xff]
      %v344 = vld [vmem:[%s328 + $0x40] sm:$0xff]
      %v345 = vld [vmem:[%s328 + $0x48] sm:$0xff]
      %v346 = vld [vmem:[%s328 + $0x50] sm:$0xff]
      %v347 = vld [vmem:[%s328 + $0x58] sm:$0xff]
      %v348 = vld [vmem:[%s328 + $0x60] sm:$0xff]
      %v349 = vld [vmem:[%s328 + $0x68] sm:$0xff]
      %v350 = vld [vmem:[%s328 + $0x70] sm:$0xff]
      %v351 = vld [vmem:[%s328 + $0x78] sm:$0xff]
      %v352 = vld [vmem:[%s328 + $0x80] sm:$0xff]
      %v353 = vld [vmem:[%s328 + $0x88] sm:$0xff]
      %v354 = vld [vmem:[%s328 + $0x90] sm:$0xff]
      %v355 = vld [vmem:[%s328 + $0x98] sm:$0xff]
      %v356 = vld [vmem:[%s328 + $0xa0] sm:$0xff]
      %v357 = vld [vmem:[%s328 + $0xa8] sm:$0xff]
      %v358 = vld [vmem:[%s328 + $0xb0] sm:$0xff]
      %v359 = vld [vmem:[%s328 + $0xb8] sm:$0xff]
      %v360 = vld [vmem:[%s328 + $0xc0] sm:$0xff]
      %v361 = vld [vmem:[%s328 + $0xc8] sm:$0xff]
      %v362 = vld [vmem:[%s328 + $0xd0] sm:$0xff]
      %v363 = vld [vmem:[%s328 + $0xd8] sm:$0xff]
      %v364 = vld [vmem:[%s328 + $0xe0] sm:$0xff]
      %v365 = vld [vmem:[%s328 + $0xe8] sm:$0xff]
      %v366 = vld [vmem:[%s328 + $0xf0] sm:$0xff]
      %v367 = vld [vmem:[%s328 + $0xf8] sm:$0xff]
      %v368 = vld [vmem:[%s328 + $0x100] sm:$0xff]
      %v369 = vld [vmem:[%s328 + $0x108] sm:$0xff]
      %v370 = vld [vmem:[%s328 + $0x110] sm:$0xff]
      %v371 = vld [vmem:[%s328 + $0x118] sm:$0xff]
      %v372 = vld [vmem:[%s328 + $0x120] sm:$0xff]
      %v373 = vld [vmem:[%s328 + $0x128] sm:$0xff]
      %v374 = vld [vmem:[%s328 + $0x130] sm:$0xff]
      %v375 = vld [vmem:[%s328 + $0x138] sm:$0xff]
      %v376 = vld [vmem:[%s328 + $0x140] sm:$0xff]
      %v377 = vld [vmem:[%s328 + $0x148] sm:$0xff]
      %v378 = vld [vmem:[%s328 + $0x150] sm:$0xff]
      %v379 = vld [vmem:[%s328 + $0x158] sm:$0xff]
      %v380 = vld [vmem:[%s328 + $0x160] sm:$0xff]
      %v381 = vld [vmem:[%s328 + $0x168] sm:$0xff]
      %v382 = vld [vmem:[%s328 + $0x170] sm:$0xff]
      %v383 = vld [vmem:[%s328 + $0x178] sm:$0xff]
      %v384 = vld [vmem:[%s328 + $0x180] sm:$0xff]
      %v385 = vld [vmem:[%s328 + $0x188] sm:$0xff]
      %v386 = vld [vmem:[%s328 + $0x190] sm:$0xff]
      %v387 = vld [vmem:[%s328 + $0x198] sm:$0xff]
      %v388 = vld [vmem:[%s328 + $0x1a0] sm:$0xff]
      %v389 = vld [vmem:[%s328 + $0x1a8] sm:$0xff]
      %v390 = vld [vmem:[%s328 + $0x1b0] sm:$0xff]
      %v391 = vld [vmem:[%s328 + $0x1b8] sm:$0xff]
      %v392 = vld [vmem:[%s328 + $0x1c0] sm:$0xff]
      %v393 = vld [vmem:[%s328 + $0x1c8] sm:$0xff]
      %v394 = vld [vmem:[%s328 + $0x1d0] sm:$0xff]
      %v395 = vld [vmem:[%s328 + $0x1d8] sm:$0xff]
      %v396 = vld [vmem:[%s328 + $0x1e0] sm:$0xff]
      %v397 = vld [vmem:[%s328 + $0x1e8] sm:$0xff]
      %v398 = vld [vmem:[%s328 + $0x1f0] sm:$0xff]
      %v399 = vld [vmem:[%s328 + $0x1f8] sm:$0xff]
      %v400 = vld [vmem:[%s1] sm:$0xff]
      %v401 = vld [vmem:[%s1 + $0x8] sm:$0xff]
      %v402 = vld [vmem:[%s1 + $0x10] sm:$0xff]
      %v403 = vld [vmem:[%s1 + $0x18] sm:$0xff]
      %v404 = vld [vmem:[%s1 + $0x20] sm:$0xff]
      %v405 = vld [vmem:[%s1 + $0x28] sm:$0xff]
      %v406 = vld [vmem:[%s1 + $0x30] sm:$0xff]
      %v407 = vld [vmem:[%s1 + $0x38] sm:$0xff]
      %v408 = vld [vmem:[%s2] sm:$0x1]
      %v410 = vlaneseq
      %v411 = vshrl.u32 %v410, 7
      %v412 = vsub.s32 0, %v411
      %v413 = vrot.slane %v408, %v412
      %vm415 = vcmask 523264
      %v417 = vsel %vm415, %v336, 0
      %v420 = vsel %vm415, %v337, 0
      %v423 = vsel %vm415, %v338, 0
      %v426 = vsel %vm415, %v339, 0
      %v429 = vsel %vm415, %v340, 0
      %v432 = vsel %vm415, %v341, 0
      %v435 = vsel %vm415, %v342, 0
      %v438 = vsel %vm415, %v343, 0
      %v441 = vsel %vm415, %v344, 0
      %v444 = vsel %vm415, %v345, 0
      %v447 = vsel %vm415, %v346, 0
      %v450 = vsel %vm415, %v347, 0
      %v453 = vsel %vm415, %v348, 0
      %v456 = vsel %vm415, %v349, 0
      %v459 = vsel %vm415, %v350, 0
      %v462 = vsel %vm415, %v351, 0
      %v465 = vsel %vm415, %v352, 0
      %v468 = vsel %vm415, %v353, 0
      %v471 = vsel %vm415, %v354, 0
      %v474 = vsel %vm415, %v355, 0
      %v477 = vsel %vm415, %v356, 0
      %v480 = vsel %vm415, %v357, 0
      %v483 = vsel %vm415, %v358, 0
      %v486 = vsel %vm415, %v359, 0
      %v489 = vsel %vm415, %v360, 0
      %v492 = vsel %vm415, %v361, 0
      %v495 = vsel %vm415, %v362, 0
      %v498 = vsel %vm415, %v363, 0
      %v501 = vsel %vm415, %v364, 0
      %v504 = vsel %vm415, %v365, 0
      %v507 = vsel %vm415, %v366, 0
      %v510 = vsel %vm415, %v367, 0
      %v513 = vsel %vm415, %v368, 0
      %v516 = vsel %vm415, %v369, 0
      %v519 = vsel %vm415, %v370, 0
      %v522 = vsel %vm415, %v371, 0
      %v525 = vsel %vm415, %v372, 0
      %v528 = vsel %vm415, %v373, 0
      %v531 = vsel %vm415, %v374, 0
      %v534 = vsel %vm415, %v375, 0
      %v537 = vsel %vm415, %v376, 0
      %v540 = vsel %vm415, %v377, 0
      %v543 = vsel %vm415, %v378, 0
      %v546 = vsel %vm415, %v379, 0
      %v549 = vsel %vm415, %v380, 0
      %v552 = vsel %vm415, %v381, 0
      %v555 = vsel %vm415, %v382, 0
      %v558 = vsel %vm415, %v383, 0
      %v561 = vsel %vm415, %v384, 0
      %v564 = vsel %vm415, %v385, 0
      %v567 = vsel %vm415, %v386, 0
      %v570 = vsel %vm415, %v387, 0
      %v573 = vsel %vm415, %v388, 0
      %v576 = vsel %vm415, %v389, 0
      %v579 = vsel %vm415, %v390, 0
      %v582 = vsel %vm415, %v391, 0
      %v585 = vsel %vm415, %v392, 0
      %v588 = vsel %vm415, %v393, 0
      %v591 = vsel %vm415, %v394, 0
      %v594 = vsel %vm415, %v395, 0
      %v597 = vsel %vm415, %v396, 0
      %v600 = vsel %vm415, %v397, 0
      %v603 = vsel %vm415, %v398, 0
      %v606 = vsel %vm415, %v399, 0
      %608 = vmatprep.subr.mxu0 0.0
      %609 = vmatpush1.msra.mxu0 %v400
      %610 = vmatprep.subr.mxu0 0.0
      %611 = vmatpush1.msra.mxu0 %v401
      %612 = vmatprep.subr.mxu0 0.0
      %613 = vmatpush1.msra.mxu0 %v402
      %614 = vmatprep.subr.mxu0 0.0
      %615 = vmatpush1.msra.mxu0 %v403
      %616 = vmatprep.subr.mxu0 0.0
      %617 = vmatpush1.msra.mxu0 %v404
      %618 = vmatprep.subr.mxu0 0.0
      %619 = vmatpush1.msra.mxu0 %v405
      %620 = vmatprep.subr.mxu0 0.0
      %621 = vmatpush1.msra.mxu0 %v406
      %622 = vmatprep.subr.mxu0 0.0
      %623 = vmatpush1.msra.mxu0 %v407
      %624 = vmatprep.subr.mxu0 0.0
      %625 = vmatpush1.msra.mxu0 0.0
      %626 = vmatprep.subr.mxu0 0.0
      %627 = vmatpush1.msra.mxu0 0.0
      %628 = vmatprep.subr.mxu0 0.0
      %629 = vmatpush1.msra.mxu0 0.0
      %630 = vmatprep.subr.mxu0 0.0
      %631 = vmatpush1.msra.mxu0 0.0
      %632 = vmatprep.subr.mxu0 0.0
      %633 = vmatpush1.msra.mxu0 0.0
      %634 = vmatprep.subr.mxu0 0.0
      %635 = vmatpush1.msra.mxu0 0.0
      %636 = vmatprep.subr.mxu0 0.0
      %637 = vmatpush1.msra.mxu0 0.0
      %638 = vmatprep.subr.mxu0 0.0
      %639 = vmatpush1.msra.mxu0 0.0
      %640 = vmatprep.subr.mxu0 0.0
      %641 = vmatpush1.msra.mxu0 0.0
      %642 = vmatprep.subr.mxu0 0.0
      %643 = vmatpush1.msra.mxu0 0.0
      %644 = vmatprep.subr.mxu0 0.0
      %645 = vmatpush1.msra.mxu0 0.0
      %646 = vmatprep.subr.mxu0 0.0
      %647 = vmatpush1.msra.mxu0 0.0
      %648 = vmatprep.subr.mxu0 0.0
      %649 = vmatpush1.msra.mxu0 0.0
      %650 = vmatprep.subr.mxu0 0.0
      %651 = vmatpush1.msra.mxu0 0.0
      %652 = vmatprep.subr.mxu0 0.0
      %653 = vmatpush1.msra.mxu0 0.0
      %654 = vmatprep.subr.mxu0 0.0
      %655 = vmatpush1.msra.mxu0 0.0
      %656 = vmatprep.subr.mxu0 0.0
      %657 = vmatpush1.msra.mxu0 0.0
      %658 = vmatprep.subr.mxu0 0.0
      %659 = vmatpush1.msra.mxu0 0.0
      %660 = vmatprep.subr.mxu0 0.0
      %661 = vmatpush1.msra.mxu0 0.0
      %662 = vmatprep.subr.mxu0 0.0
      %663 = vmatpush1.msra.mxu0 0.0
      %664 = vmatprep.subr.mxu0 0.0
      %665 = vmatpush1.msra.mxu0 0.0
      %666 = vmatprep.subr.mxu0 0.0
      %667 = vmatpush1.msra.mxu0 0.0
      %668 = vmatprep.subr.mxu0 0.0
      %669 = vmatpush1.msra.mxu0 0.0
      %670 = vmatprep.subr.mxu0 0.0
      %671 = vmatpush1.msra.mxu0 0.0
      %672 = vmatprep.mubr.f32.mxu0 0.0
      %673 = vmatmul.mubr.f32.gmra.mrb[0].mxu0 %v417
      %v674 = vpop.f32.mrb[0].mxu0
      %v675 = vadd.f32 %v413, %v674
      %v676 = vpop.f32.mrb[0].mxu0
      %677 = vmatprep.mubr.f32.mxu0 0.0
      %678 = vmatmul.mubr.f32.gmra.mrb[0].mxu0 %v420
      %v679 = vpop.f32.mrb[0].mxu0
      %v680 = vadd.f32 %v413, %v679
      %v681 = vpop.f32.mrb[0].mxu0
      %682 = vmatprep.mubr.f32.mxu0 0.0
      %683 = vmatmul.mubr.f32.gmra.mrb[0].mxu0 %v423
      %v684 = vpop.f32.mrb[0].mxu0
      %v685 = vadd.f32 %v413, %v684
      %v686 = vpop.f32.mrb[0].mxu0
      %687 = vmatprep.mubr.f32.mxu0 0.0
      %688 = vmatmul.mubr.f32.gmra.mrb[0].mxu0 %v426
      %v689 = vpop.f32.mrb[0].mxu0
      %v690 = vadd.f32 %v413, %v689
      %v691 = vpop.f32.mrb[0].mxu0
      %692 = vmatprep.mubr.f32.mxu0 0.0
      %693 = vmatmul.mubr.f32.gmra.mrb[0].mxu0 %v429
      %v694 = vpop.f32.mrb[0].mxu0
      %v695 = vadd.f32 %v413, %v694
      %v696 = vpop.f32.mrb[0].mxu0
      %697 = vmatprep.mubr.f32.mxu0 0.0
      %698 = vmatmul.mubr.f32.gmra.mrb[0].mxu0 %v432
      %v699 = vpop.f32.mrb[0].mxu0
      %v700 = vadd.f32 %v413, %v699
      %v701 = vpop.f32.mrb[0].mxu0
      %702 = vmatprep.mubr.f32.mxu0 0.0
      %703 = vmatmul.mubr.f32.gmra.mrb[0].mxu0 %v435
      %v704 = vpop.f32.mrb[0].mxu0
      %v705 = vadd.f32 %v413, %v704
      %v706 = vpop.f32.mrb[0].mxu0
      %707 = vmatprep.mubr.f32.mxu0 0.0
      %708 = vmatmul.mubr.f32.gmra.mrb[0].mxu0 %v438
      %v709 = vpop.f32.mrb[0].mxu0
      %v710 = vadd.f32 %v413, %v709
      %v711 = vpop.f32.mrb[0].mxu0
      %712 = vmatprep.mubr.f32.mxu0 0.0
      %713 = vmatmul.mubr.f32.gmra.mrb[0].mxu0 %v441
      %v714 = vpop.f32.mrb[0].mxu0
      %v715 = vadd.f32 %v413, %v714
      %v716 = vpop.f32.mrb[0].mxu0
      %717 = vmatprep.mubr.f32.mxu0 0.0
      %718 = vmatmul.mubr.f32.gmra.mrb[0].mxu0 %v444
      %v719 = vpop.f32.mrb[0].mxu0
      %v720 = vadd.f32 %v413, %v719
      %v721 = vpop.f32.mrb[0].mxu0
      %722 = vmatprep.mubr.f32.mxu0 0.0
      %723 = vmatmul.mubr.f32.gmra.mrb[0].mxu0 %v447
      %v724 = vpop.f32.mrb[0].mxu0
      %v725 = vadd.f32 %v413, %v724
      %v726 = vpop.f32.mrb[0].mxu0
      %727 = vmatprep.mubr.f32.mxu0 0.0
      %728 = vmatmul.mubr.f32.gmra.mrb[0].mxu0 %v450
      %v729 = vpop.f32.mrb[0].mxu0
      %v730 = vadd.f32 %v413, %v729
      %v731 = vpop.f32.mrb[0].mxu0
      %732 = vmatprep.mubr.f32.mxu0 0.0
      %733 = vmatmul.mubr.f32.gmra.mrb[0].mxu0 %v453
      %v734 = vpop.f32.mrb[0].mxu0
      %v735 = vadd.f32 %v413, %v734
      %v736 = vpop.f32.mrb[0].mxu0
      %737 = vmatprep.mubr.f32.mxu0 0.0
      %738 = vmatmul.mubr.f32.gmra.mrb[0].mxu0 %v456
      %v739 = vpop.f32.mrb[0].mxu0
      %v740 = vadd.f32 %v413, %v739
      %v741 = vpop.f32.mrb[0].mxu0
      %742 = vmatprep.mubr.f32.mxu0 0.0
      %743 = vmatmul.mubr.f32.gmra.mrb[0].mxu0 %v459
      %v744 = vpop.f32.mrb[0].mxu0
      %v745 = vadd.f32 %v413, %v744
      %v746 = vpop.f32.mrb[0].mxu0
      %747 = vmatprep.mubr.f32.mxu0 0.0
      %748 = vmatmul.mubr.f32.gmra.mrb[0].mxu0 %v462
      %v749 = vpop.f32.mrb[0].mxu0
      %v750 = vadd.f32 %v413, %v749
      %v751 = vpop.f32.mrb[0].mxu0
      %752 = vmatprep.mubr.f32.mxu0 0.0
      %753 = vmatmul.mubr.f32.gmra.mrb[0].mxu0 %v465
      %v754 = vpop.f32.mrb[0].mxu0
      %v755 = vadd.f32 %v413, %v754
      %v756 = vpop.f32.mrb[0].mxu0
      %757 = vmatprep.mubr.f32.mxu0 0.0
      %758 = vmatmul.mubr.f32.gmra.mrb[0].mxu0 %v468
      %v759 = vpop.f32.mrb[0].mxu0
      %v760 = vadd.f32 %v413, %v759
      %v761 = vpop.f32.mrb[0].mxu0
      %762 = vmatprep.mubr.f32.mxu0 0.0
      %763 = vmatmul.mubr.f32.gmra.mrb[0].mxu0 %v471
      %v764 = vpop.f32.mrb[0].mxu0
      %v765 = vadd.f32 %v413, %v764
      %v766 = vpop.f32.mrb[0].mxu0
      %767 = vmatprep.mubr.f32.mxu0 0.0
      %768 = vmatmul.mubr.f32.gmra.mrb[0].mxu0 %v474
      %v769 = vpop.f32.mrb[0].mxu0
      %v770 = vadd.f32 %v413, %v769
      %v771 = vpop.f32.mrb[0].mxu0
      %772 = vmatprep.mubr.f32.mxu0 0.0
      %773 = vmatmul.mubr.f32.gmra.mrb[0].mxu0 %v477
      %v774 = vpop.f32.mrb[0].mxu0
      %v775 = vadd.f32 %v413, %v774
      %v776 = vpop.f32.mrb[0].mxu0
      %777 = vmatprep.mubr.f32.mxu0 0.0
      %778 = vmatmul.mubr.f32.gmra.mrb[0].mxu0 %v480
      %v779 = vpop.f32.mrb[0].mxu0
      %v780 = vadd.f32 %v413, %v779
      %v781 = vpop.f32.mrb[0].mxu0
      %782 = vmatprep.mubr.f32.mxu0 0.0
      %783 = vmatmul.mubr.f32.gmra.mrb[0].mxu0 %v483
      %v784 = vpop.f32.mrb[0].mxu0
      %v785 = vadd.f32 %v413, %v784
      %v786 = vpop.f32.mrb[0].mxu0
      %787 = vmatprep.mubr.f32.mxu0 0.0
      %788 = vmatmul.mubr.f32.gmra.mrb[0].mxu0 %v486
      %v789 = vpop.f32.mrb[0].mxu0
      %v790 = vadd.f32 %v413, %v789
      %v791 = vpop.f32.mrb[0].mxu0
      %792 = vmatprep.mubr.f32.mxu0 0.0
      %793 = vmatmul.mubr.f32.gmra.mrb[0].mxu0 %v489
      %v794 = vpop.f32.mrb[0].mxu0
      %v795 = vadd.f32 %v413, %v794
      %v796 = vpop.f32.mrb[0].mxu0
      %797 = vmatprep.mubr.f32.mxu0 0.0
      %798 = vmatmul.mubr.f32.gmra.mrb[0].mxu0 %v492
      %v799 = vpop.f32.mrb[0].mxu0
      %v800 = vadd.f32 %v413, %v799
      %v801 = vpop.f32.mrb[0].mxu0
      %802 = vmatprep.mubr.f32.mxu0 0.0
      %803 = vmatmul.mubr.f32.gmra.mrb[0].mxu0 %v495
      %v804 = vpop.f32.mrb[0].mxu0
      %v805 = vadd.f32 %v413, %v804
      %v806 = vpop.f32.mrb[0].mxu0
      %807 = vmatprep.mubr.f32.mxu0 0.0
      %808 = vmatmul.mubr.f32.gmra.mrb[0].mxu0 %v498
      %v809 = vpop.f32.mrb[0].mxu0
      %v810 = vadd.f32 %v413, %v809
      %v811 = vpop.f32.mrb[0].mxu0
      %812 = vmatprep.mubr.f32.mxu0 0.0
      %813 = vmatmul.mubr.f32.gmra.mrb[0].mxu0 %v501
      %v814 = vpop.f32.mrb[0].mxu0
      %v815 = vadd.f32 %v413, %v814
      %v816 = vpop.f32.mrb[0].mxu0
      %817 = vmatprep.mubr.f32.mxu0 0.0
      %818 = vmatmul.mubr.f32.gmra.mrb[0].mxu0 %v504
      %v819 = vpop.f32.mrb[0].mxu0
      %v820 = vadd.f32 %v413, %v819
      %v821 = vpop.f32.mrb[0].mxu0
      %822 = vmatprep.mubr.f32.mxu0 0.0
      %823 = vmatmul.mubr.f32.gmra.mrb[0].mxu0 %v507
      %v824 = vpop.f32.mrb[0].mxu0
      %v825 = vadd.f32 %v413, %v824
      %v826 = vpop.f32.mrb[0].mxu0
      %827 = vmatprep.mubr.f32.mxu0 0.0
      %828 = vmatmul.mubr.f32.gmra.mrb[0].mxu0 %v510
      %v829 = vpop.f32.mrb[0].mxu0
      %v830 = vadd.f32 %v413, %v829
      %v831 = vpop.f32.mrb[0].mxu0
      %832 = vmatprep.mubr.f32.mxu0 0.0
      %833 = vmatmul.mubr.f32.gmra.mrb[0].mxu0 %v513
      %v834 = vpop.f32.mrb[0].mxu0
      %v835 = vadd.f32 %v413, %v834
      %v836 = vpop.f32.mrb[0].mxu0
      %837 = vmatprep.mubr.f32.mxu0 0.0
      %838 = vmatmul.mubr.f32.gmra.mrb[0].mxu0 %v516
      %v839 = vpop.f32.mrb[0].mxu0
      %v840 = vadd.f32 %v413, %v839
      %v841 = vpop.f32.mrb[0].mxu0
      %842 = vmatprep.mubr.f32.mxu0 0.0
      %843 = vmatmul.mubr.f32.gmra.mrb[0].mxu0 %v519
      %v844 = vpop.f32.mrb[0].mxu0
      %v845 = vadd.f32 %v413, %v844
      %v846 = vpop.f32.mrb[0].mxu0
      %847 = vmatprep.mubr.f32.mxu0 0.0
      %848 = vmatmul.mubr.f32.gmra.mrb[0].mxu0 %v522
      %v849 = vpop.f32.mrb[0].mxu0
      %v850 = vadd.f32 %v413, %v849
      %v851 = vpop.f32.mrb[0].mxu0
      %852 = vmatprep.mubr.f32.mxu0 0.0
      %853 = vmatmul.mubr.f32.gmra.mrb[0].mxu0 %v525
      %v854 = vpop.f32.mrb[0].mxu0
      %v855 = vadd.f32 %v413, %v854
      %v856 = vpop.f32.mrb[0].mxu0
      %857 = vmatprep.mubr.f32.mxu0 0.0
      %858 = vmatmul.mubr.f32.gmra.mrb[0].mxu0 %v528
      %v859 = vpop.f32.mrb[0].mxu0
      %v860 = vadd.f32 %v413, %v859
      %v861 = vpop.f32.mrb[0].mxu0
      %862 = vmatprep.mubr.f32.mxu0 0.0
      %863 = vmatmul.mubr.f32.gmra.mrb[0].mxu0 %v531
      %v864 = vpop.f32.mrb[0].mxu0
      %v865 = vadd.f32 %v413, %v864
      %v866 = vpop.f32.mrb[0].mxu0
      %867 = vmatprep.mubr.f32.mxu0 0.0
      %868 = vmatmul.mubr.f32.gmra.mrb[0].mxu0 %v534
      %v869 = vpop.f32.mrb[0].mxu0
      %v870 = vadd.f32 %v413, %v869
      %v871 = vpop.f32.mrb[0].mxu0
      %872 = vmatprep.mubr.f32.mxu0 0.0
      %873 = vmatmul.mubr.f32.gmra.mrb[0].mxu0 %v537
      %v874 = vpop.f32.mrb[0].mxu0
      %v875 = vadd.f32 %v413, %v874
      %v876 = vpop.f32.mrb[0].mxu0
      %877 = vmatprep.mubr.f32.mxu0 0.0
      %878 = vmatmul.mubr.f32.gmra.mrb[0].mxu0 %v540
      %v879 = vpop.f32.mrb[0].mxu0
      %v880 = vadd.f32 %v413, %v879
      %v881 = vpop.f32.mrb[0].mxu0
      %882 = vmatprep.mubr.f32.mxu0 0.0
      %883 = vmatmul.mubr.f32.gmra.mrb[0].mxu0 %v543
      %v884 = vpop.f32.mrb[0].mxu0
      %v885 = vadd.f32 %v413, %v884
      %v886 = vpop.f32.mrb[0].mxu0
      %887 = vmatprep.mubr.f32.mxu0 0.0
      %888 = vmatmul.mubr.f32.gmra.mrb[0].mxu0 %v546
      %v889 = vpop.f32.mrb[0].mxu0
      %v890 = vadd.f32 %v413, %v889
      %v891 = vpop.f32.mrb[0].mxu0
      %892 = vmatprep.mubr.f32.mxu0 0.0
      %893 = vmatmul.mubr.f32.gmra.mrb[0].mxu0 %v549
      %v894 = vpop.f32.mrb[0].mxu0
      %v895 = vadd.f32 %v413, %v894
      %v896 = vpop.f32.mrb[0].mxu0
      %897 = vmatprep.mubr.f32.mxu0 0.0
      %898 = vmatmul.mubr.f32.gmra.mrb[0].mxu0 %v552
      %v899 = vpop.f32.mrb[0].mxu0
      %v900 = vadd.f32 %v413, %v899
      %v901 = vpop.f32.mrb[0].mxu0
      %902 = vmatprep.mubr.f32.mxu0 0.0
      %903 = vmatmul.mubr.f32.gmra.mrb[0].mxu0 %v555
      %v904 = vpop.f32.mrb[0].mxu0
      %v905 = vadd.f32 %v413, %v904
      %v906 = vpop.f32.mrb[0].mxu0
      %907 = vmatprep.mubr.f32.mxu0 0.0
      %908 = vmatmul.mubr.f32.gmra.mrb[0].mxu0 %v558
      %v909 = vpop.f32.mrb[0].mxu0
      %v910 = vadd.f32 %v413, %v909
      %v911 = vpop.f32.mrb[0].mxu0
      %912 = vmatprep.mubr.f32.mxu0 0.0
      %913 = vmatmul.mubr.f32.gmra.mrb[0].mxu0 %v561
      %v914 = vpop.f32.mrb[0].mxu0
      %v915 = vadd.f32 %v413, %v914
      %v916 = vpop.f32.mrb[0].mxu0
      %917 = vmatprep.mubr.f32.mxu0 0.0
      %918 = vmatmul.mubr.f32.gmra.mrb[0].mxu0 %v564
      %v919 = vpop.f32.mrb[0].mxu0
      %v920 = vadd.f32 %v413, %v919
      %v921 = vpop.f32.mrb[0].mxu0
      %922 = vmatprep.mubr.f32.mxu0 0.0
      %923 = vmatmul.mubr.f32.gmra.mrb[0].mxu0 %v567
      %v924 = vpop.f32.mrb[0].mxu0
      %v925 = vadd.f32 %v413, %v924
      %v926 = vpop.f32.mrb[0].mxu0
      %927 = vmatprep.mubr.f32.mxu0 0.0
      %928 = vmatmul.mubr.f32.gmra.mrb[0].mxu0 %v570
      %v929 = vpop.f32.mrb[0].mxu0
      %v930 = vadd.f32 %v413, %v929
      %v931 = vpop.f32.mrb[0].mxu0
      %932 = vmatprep.mubr.f32.mxu0 0.0
      %933 = vmatmul.mubr.f32.gmra.mrb[0].mxu0 %v573
      %v934 = vpop.f32.mrb[0].mxu0
      %v935 = vadd.f32 %v413, %v934
      %v936 = vpop.f32.mrb[0].mxu0
      %937 = vmatprep.mubr.f32.mxu0 0.0
      %938 = vmatmul.mubr.f32.gmra.mrb[0].mxu0 %v576
      %v939 = vpop.f32.mrb[0].mxu0
      %v940 = vadd.f32 %v413, %v939
      %v941 = vpop.f32.mrb[0].mxu0
      %942 = vmatprep.mubr.f32.mxu0 0.0
      %943 = vmatmul.mubr.f32.gmra.mrb[0].mxu0 %v579
      %v944 = vpop.f32.mrb[0].mxu0
      %v945 = vadd.f32 %v413, %v944
      %v946 = vpop.f32.mrb[0].mxu0
      %947 = vmatprep.mubr.f32.mxu0 0.0
      %948 = vmatmul.mubr.f32.gmra.mrb[0].mxu0 %v582
      %v949 = vpop.f32.mrb[0].mxu0
      %v950 = vadd.f32 %v413, %v949
      %v951 = vpop.f32.mrb[0].mxu0
      %952 = vmatprep.mubr.f32.mxu0 0.0
      %953 = vmatmul.mubr.f32.gmra.mrb[0].mxu0 %v585
      %v954 = vpop.f32.mrb[0].mxu0
      %v955 = vadd.f32 %v413, %v954
      %v956 = vpop.f32.mrb[0].mxu0
      %957 = vmatprep.mubr.f32.mxu0 0.0
      %958 = vmatmul.mubr.f32.gmra.mrb[0].mxu0 %v588
      %v959 = vpop.f32.mrb[0].mxu0
      %v960 = vadd.f32 %v413, %v959
      %v961 = vpop.f32.mrb[0].mxu0
      %962 = vmatprep.mubr.f32.mxu0 0.0
      %963 = vmatmul.mubr.f32.gmra.mrb[0].mxu0 %v591
      %v964 = vpop.f32.mrb[0].mxu0
      %v965 = vadd.f32 %v413, %v964
      %v966 = vpop.f32.mrb[0].mxu0
      %967 = vmatprep.mubr.f32.mxu0 0.0
      %968 = vmatmul.mubr.f32.gmra.mrb[0].mxu0 %v594
      %v969 = vpop.f32.mrb[0].mxu0
      %v970 = vadd.f32 %v413, %v969
      %v971 = vpop.f32.mrb[0].mxu0
      %972 = vmatprep.mubr.f32.mxu0 0.0
      %973 = vmatmul.mubr.f32.gmra.mrb[0].mxu0 %v597
      %v974 = vpop.f32.mrb[0].mxu0
      %v975 = vadd.f32 %v413, %v974
      %v976 = vpop.f32.mrb[0].mxu0
      %977 = vmatprep.mubr.f32.mxu0 0.0
      %978 = vmatmul.mubr.f32.gmra.mrb[0].mxu0 %v600
      %v979 = vpop.f32.mrb[0].mxu0
      %v980 = vadd.f32 %v413, %v979
      %v981 = vpop.f32.mrb[0].mxu0
      %982 = vmatprep.mubr.f32.mxu0 0.0
      %983 = vmatmul.mubr.f32.gmra.mrb[0].mxu0 %v603
      %v984 = vpop.f32.mrb[0].mxu0
      %v985 = vadd.f32 %v413, %v984
      %v986 = vpop.f32.mrb[0].mxu0
      %987 = vmatprep.mubr.f32.mxu0 0.0
      %988 = vmatmul.mubr.f32.gmra.mrb[0].mxu0 %v606
      %v989 = vpop.f32.mrb[0].mxu0
      %v990 = vadd.f32 %v413, %v989
      %v991 = vpop.f32.mrb[0].mxu0
      %992 = vdwg.mxu0
      %v993 = vmax.f32 %v675, 0.0
      %v994 = vmax.f32 %v680, 0.0
      %v995 = vmax.f32 %v685, 0.0
      %v996 = vmax.f32 %v690, 0.0
      %v997 = vmax.f32 %v695, 0.0
      %v998 = vmax.f32 %v700, 0.0
      %v999 = vmax.f32 %v705, 0.0
      %v1000 = vmax.f32 %v710, 0.0
      %v1001 = vmax.f32 %v715, 0.0
      %v1002 = vmax.f32 %v720, 0.0
      %v1003 = vmax.f32 %v725, 0.0
      %v1004 = vmax.f32 %v730, 0.0
      %v1005 = vmax.f32 %v735, 0.0
      %v1006 = vmax.f32 %v740, 0.0
      %v1007 = vmax.f32 %v745, 0.0
      %v1008 = vmax.f32 %v750, 0.0
      %v1009 = vmax.f32 %v755, 0.0
      %v1010 = vmax.f32 %v760, 0.0
      %v1011 = vmax.f32 %v765, 0.0
      %v1012 = vmax.f32 %v770, 0.0
      %v1013 = vmax.f32 %v775, 0.0
      %v1014 = vmax.f32 %v780, 0.0
      %v1015 = vmax.f32 %v785, 0.0
      %v1016 = vmax.f32 %v790, 0.0
      %v1017 = vmax.f32 %v795, 0.0
      %v1018 = vmax.f32 %v800, 0.0
      %v1019 = vmax.f32 %v805, 0.0
      %v1020 = vmax.f32 %v810, 0.0
      %v1021 = vmax.f32 %v815, 0.0
      %v1022 = vmax.f32 %v820, 0.0
      %v1023 = vmax.f32 %v825, 0.0
      %v1024 = vmax.f32 %v830, 0.0
      %v1025 = vmax.f32 %v835, 0.0
      %v1026 = vmax.f32 %v840, 0.0
      %v1027 = vmax.f32 %v845, 0.0
      %v1028 = vmax.f32 %v850, 0.0
      %v1029 = vmax.f32 %v855, 0.0
      %v1030 = vmax.f32 %v860, 0.0
      %v1031 = vmax.f32 %v865, 0.0
      %v1032 = vmax.f32 %v870, 0.0
      %v1033 = vmax.f32 %v875, 0.0
      %v1034 = vmax.f32 %v880, 0.0
      %v1035 = vmax.f32 %v885, 0.0
      %v1036 = vmax.f32 %v890, 0.0
      %v1037 = vmax.f32 %v895, 0.0
      %v1038 = vmax.f32 %v900, 0.0
      %v1039 = vmax.f32 %v905, 0.0
      %v1040 = vmax.f32 %v910, 0.0
      %v1041 = vmax.f32 %v915, 0.0
      %v1042 = vmax.f32 %v920, 0.0
      %v1043 = vmax.f32 %v925, 0.0
      %v1044 = vmax.f32 %v930, 0.0
      %v1045 = vmax.f32 %v935, 0.0
      %v1046 = vmax.f32 %v940, 0.0
      %v1047 = vmax.f32 %v945, 0.0
      %v1048 = vmax.f32 %v950, 0.0
      %v1049 = vmax.f32 %v955, 0.0
      %v1050 = vmax.f32 %v960, 0.0
      %v1051 = vmax.f32 %v965, 0.0
      %v1052 = vmax.f32 %v970, 0.0
      %v1053 = vmax.f32 %v975, 0.0
      %v1054 = vmax.f32 %v980, 0.0
      %v1055 = vmax.f32 %v985, 0.0
      %v1056 = vmax.f32 %v990, 0.0
      %v1057 = vld [vmem:[%s3] sm:$0xff]
      %v1058 = vld [vmem:[%s3 + $0x8] sm:$0xff]
      %v1059 = vld [vmem:[%s3 + $0x10] sm:$0xff]
      %v1060 = vld [vmem:[%s3 + $0x18] sm:$0xff]
      %v1061 = vld [vmem:[%s4] sm:$0x1]
      %v1063 = vlaneseq
      %v1064 = vshrl.u32 %v1063, 7
      %v1065 = vsub.s32 0, %v1064
      %v1066 = vrot.slane %v1061, %v1065
      %vm1068 = vcmask 261120
      %v1070 = vsel %vm1068, %v993, 0
      %v1073 = vsel %vm1068, %v994, 0
      %v1076 = vsel %vm1068, %v995, 0
      %v1079 = vsel %vm1068, %v996, 0
      %v1082 = vsel %vm1068, %v997, 0
      %v1085 = vsel %vm1068, %v998, 0
      %v1088 = vsel %vm1068, %v999, 0
      %v1091 = vsel %vm1068, %v1000, 0
      %v1094 = vsel %vm1068, %v1001, 0
      %v1097 = vsel %vm1068, %v1002, 0
      %v1100 = vsel %vm1068, %v1003, 0
      %v1103 = vsel %vm1068, %v1004, 0
      %v1106 = vsel %vm1068, %v1005, 0
      %v1109 = vsel %vm1068, %v1006, 0
      %v1112 = vsel %vm1068, %v1007, 0
      %v1115 = vsel %vm1068, %v1008, 0
      %v1118 = vsel %vm1068, %v1009, 0
      %v1121 = vsel %vm1068, %v1010, 0
      %v1124 = vsel %vm1068, %v1011, 0
      %v1127 = vsel %vm1068, %v1012, 0
      %v1130 = vsel %vm1068, %v1013, 0
      %v1133 = vsel %vm1068, %v1014, 0
      %v1136 = vsel %vm1068, %v1015, 0
      %v1139 = vsel %vm1068, %v1016, 0
      %v1142 = vsel %vm1068, %v1017, 0
      %v1145 = vsel %vm1068, %v1018, 0
      %v1148 = vsel %vm1068, %v1019, 0
      %v1151 = vsel %vm1068, %v1020, 0
      %v1154 = vsel %vm1068, %v1021, 0
      %v1157 = vsel %vm1068, %v1022, 0
      %v1160 = vsel %vm1068, %v1023, 0
      %v1163 = vsel %vm1068, %v1024, 0
      %v1166 = vsel %vm1068, %v1025, 0
      %v1169 = vsel %vm1068, %v1026, 0
      %v1172 = vsel %vm1068, %v1027, 0
      %v1175 = vsel %vm1068, %v1028, 0
      %v1178 = vsel %vm1068, %v1029, 0
      %v1181 = vsel %vm1068, %v1030, 0
      %v1184 = vsel %vm1068, %v1031, 0
      %v1187 = vsel %vm1068, %v1032, 0
      %v1190 = vsel %vm1068, %v1033, 0
      %v1193 = vsel %vm1068, %v1034, 0
      %v1196 = vsel %vm1068, %v1035, 0
      %v1199 = vsel %vm1068, %v1036, 0
      %v1202 = vsel %vm1068, %v1037, 0
      %v1205 = vsel %vm1068, %v1038, 0
      %v1208 = vsel %vm1068, %v1039, 0
      %v1211 = vsel %vm1068, %v1040, 0
      %v1214 = vsel %vm1068, %v1041, 0
      %v1217 = vsel %vm1068, %v1042, 0
      %v1220 = vsel %vm1068, %v1043, 0
      %v1223 = vsel %vm1068, %v1044, 0
      %v1226 = vsel %vm1068, %v1045, 0
      %v1229 = vsel %vm1068, %v1046, 0
      %v1232 = vsel %vm1068, %v1047, 0
      %v1235 = vsel %vm1068, %v1048, 0
      %v1238 = vsel %vm1068, %v1049, 0
      %v1241 = vsel %vm1068, %v1050, 0
      %v1244 = vsel %vm1068, %v1051, 0
      %v1247 = vsel %vm1068, %v1052, 0
      %v1250 = vsel %vm1068, %v1053, 0
      %v1253 = vsel %vm1068, %v1054, 0
      %v1256 = vsel %vm1068, %v1055, 0
      %v1259 = vsel %vm1068, %v1056, 0
      %1261 = vmatprep.subr.mxu0 0.0
      %1262 = vmatpush1.msra.mxu0 %v1057
      %1263 = vmatprep.subr.mxu0 0.0
      %1264 = vmatpush1.msra.mxu0 %v1058
      %1265 = vmatprep.subr.mxu0 0.0
      %1266 = vmatpush1.msra.mxu0 %v1059
      %1267 = vmatprep.subr.mxu0 0.0
      %1268 = vmatpush1.msra.mxu0 %v1060
      %1269 = vmatprep.subr.mxu0 0.0
      %1270 = vmatpush1.msra.mxu0 0.0
      %1271 = vmatprep.subr.mxu0 0.0
      %1272 = vmatpush1.msra.mxu0 0.0
      %1273 = vmatprep.subr.mxu0 0.0
      %1274 = vmatpush1.msra.mxu0 0.0
      %1275 = vmatprep.subr.mxu0 0.0
      %1276 = vmatpush1.msra.mxu0 0.0
      %1277 = vmatprep.subr.mxu0 0.0
      %1278 = vmatpush1.msra.mxu0 0.0
      %1279 = vmatprep.subr.mxu0 0.0
      %1280 = vmatpush1.msra.mxu0 0.0
      %1281 = vmatprep.subr.mxu0 0.0
      %1282 = vmatpush1.msra.mxu0 0.0
      %1283 = vmatprep.subr.mxu0 0.0
      %1284 = vmatpush1.msra.mxu0 0.0
      %1285 = vmatprep.subr.mxu0 0.0
      %1286 = vmatpush1.msra.mxu0 0.0
      %1287 = vmatprep.subr.mxu0 0.0
      %1288 = vmatpush1.msra.mxu0 0.0
      %1289 = vmatprep.subr.mxu0 0.0
      %1290 = vmatpush1.msra.mxu0 0.0
      %1291 = vmatprep.subr.mxu0 0.0
      %1292 = vmatpush1.msra.mxu0 0.0
      %1293 = vmatprep.subr.mxu0 0.0
      %1294 = vmatpush1.msra.mxu0 0.0
      %1295 = vmatprep.subr.mxu0 0.0
      %1296 = vmatpush1.msra.mxu0 0.0
      %1297 = vmatprep.subr.mxu0 0.0
      %1298 = vmatpush1.msra.mxu0 0.0
      %1299 = vmatprep.subr.mxu0 0.0
      %1300 = vmatpush1.msra.mxu0 0.0
      %1301 = vmatprep.subr.mxu0 0.0
      %1302 = vmatpush1.msra.mxu0 0.0
      %1303 = vmatprep.subr.mxu0 0.0
      %1304 = vmatpush1.msra.mxu0 0.0
      %1305 = vmatprep.subr.mxu0 0.0
      %1306 = vmatpush1.msra.mxu0 0.0
      %1307 = vmatprep.subr.mxu0 0.0
      %1308 = vmatpush1.msra.mxu0 0.0
      %1309 = vmatprep.subr.mxu0 0.0
      %1310 = vmatpush1.msra.mxu0 0.0
      %1311 = vmatprep.subr.mxu0 0.0
      %1312 = vmatpush1.msra.mxu0 0.0
      %1313 = vmatprep.subr.mxu0 0.0
      %1314 = vmatpush1.msra.mxu0 0.0
      %1315 = vmatprep.subr.mxu0 0.0
      %1316 = vmatpush1.msra.mxu0 0.0
      %1317 = vmatprep.subr.mxu0 0.0
      %1318 = vmatpush1.msra.mxu0 0.0
      %1319 = vmatprep.subr.mxu0 0.0
      %1320 = vmatpush1.msra.mxu0 0.0
      %1321 = vmatprep.subr.mxu0 0.0
      %1322 = vmatpush1.msra.mxu0 0.0
      %1323 = vmatprep.subr.mxu0 0.0
      %1324 = vmatpush1.msra.mxu0 0.0
      %1325 = vmatprep.mubr.f32.mxu0 0.0
      %1326 = vmatmul.mubr.f32.gmra.mrb[0].mxu0 %v1070
      %v1327 = vpop.f32.mrb[0].mxu0
      %v1328 = vadd.f32 %v1066, %v1327
      %v1329 = vpop.f32.mrb[0].mxu0
      %1330 = vmatprep.mubr.f32.mxu0 0.0
      %1331 = vmatmul.mubr.f32.gmra.mrb[0].mxu0 %v1073
      %v1332 = vpop.f32.mrb[0].mxu0
      %v1333 = vadd.f32 %v1066, %v1332
      %v1334 = vpop.f32.mrb[0].mxu0
      %1335 = vmatprep.mubr.f32.mxu0 0.0
      %1336 = vmatmul.mubr.f32.gmra.mrb[0].mxu0 %v1076
      %v1337 = vpop.f32.mrb[0].mxu0
      %v1338 = vadd.f32 %v1066, %v1337
      %v1339 = vpop.f32.mrb[0].mxu0
      %1340 = vmatprep.mubr.f32.mxu0 0.0
      %1341 = vmatmul.mubr.f32.gmra.mrb[0].mxu0 %v1079
      %v1342 = vpop.f32.mrb[0].mxu0
      %v1343 = vadd.f32 %v1066, %v1342
      %v1344 = vpop.f32.mrb[0].mxu0
      %1345 = vmatprep.mubr.f32.mxu0 0.0
      %1346 = vmatmul.mubr.f32.gmra.mrb[0].mxu0 %v1082
      %v1347 = vpop.f32.mrb[0].mxu0
      %v1348 = vadd.f32 %v1066, %v1347
      %v1349 = vpop.f32.mrb[0].mxu0
      %1350 = vmatprep.mubr.f32.mxu0 0.0
      %1351 = vmatmul.mubr.f32.gmra.mrb[0].mxu0 %v1085
      %v1352 = vpop.f32.mrb[0].mxu0
      %v1353 = vadd.f32 %v1066, %v1352
      %v1354 = vpop.f32.mrb[0].mxu0
      %1355 = vmatprep.mubr.f32.mxu0 0.0
      %1356 = vmatmul.mubr.f32.gmra.mrb[0].mxu0 %v1088
      %v1357 = vpop.f32.mrb[0].mxu0
      %v1358 = vadd.f32 %v1066, %v1357
      %v1359 = vpop.f32.mrb[0].mxu0
      %1360 = vmatprep.mubr.f32.mxu0 0.0
      %1361 = vmatmul.mubr.f32.gmra.mrb[0].mxu0 %v1091
      %v1362 = vpop.f32.mrb[0].mxu0
      %v1363 = vadd.f32 %v1066, %v1362
      %v1364 = vpop.f32.mrb[0].mxu0
      %1365 = vmatprep.mubr.f32.mxu0 0.0
      %1366 = vmatmul.mubr.f32.gmra.mrb[0].mxu0 %v1094
      %v1367 = vpop.f32.mrb[0].mxu0
      %v1368 = vadd.f32 %v1066, %v1367
      %v1369 = vpop.f32.mrb[0].mxu0
      %1370 = vmatprep.mubr.f32.mxu0 0.0
      %1371 = vmatmul.mubr.f32.gmra.mrb[0].mxu0 %v1097
      %v1372 = vpop.f32.mrb[0].mxu0
      %v1373 = vadd.f32 %v1066, %v1372
      %v1374 = vpop.f32.mrb[0].mxu0
      %1375 = vmatprep.mubr.f32.mxu0 0.0
      %1376 = vmatmul.mubr.f32.gmra.mrb[0].mxu0 %v1100
      %v1377 = vpop.f32.mrb[0].mxu0
      %v1378 = vadd.f32 %v1066, %v1377
      %v1379 = vpop.f32.mrb[0].mxu0
      %1380 = vmatprep.mubr.f32.mxu0 0.0
      %1381 = vmatmul.mubr.f32.gmra.mrb[0].mxu0 %v1103
      %v1382 = vpop.f32.mrb[0].mxu0
      %v1383 = vadd.f32 %v1066, %v1382
      %v1384 = vpop.f32.mrb[0].mxu0
      %1385 = vmatprep.mubr.f32.mxu0 0.0
      %1386 = vmatmul.mubr.f32.gmra.mrb[0].mxu0 %v1106
      %v1387 = vpop.f32.mrb[0].mxu0
      %v1388 = vadd.f32 %v1066, %v1387
      %v1389 = vpop.f32.mrb[0].mxu0
      %1390 = vmatprep.mubr.f32.mxu0 0.0
      %1391 = vmatmul.mubr.f32.gmra.mrb[0].mxu0 %v1109
      %v1392 = vpop.f32.mrb[0].mxu0
      %v1393 = vadd.f32 %v1066, %v1392
      %v1394 = vpop.f32.mrb[0].mxu0
      %1395 = vmatprep.mubr.f32.mxu0 0.0
      %1396 = vmatmul.mubr.f32.gmra.mrb[0].mxu0 %v1112
      %v1397 = vpop.f32.mrb[0].mxu0
      %v1398 = vadd.f32 %v1066, %v1397
      %v1399 = vpop.f32.mrb[0].mxu0
      %1400 = vmatprep.mubr.f32.mxu0 0.0
      %1401 = vmatmul.mubr.f32.gmra.mrb[0].mxu0 %v1115
      %v1402 = vpop.f32.mrb[0].mxu0
      %v1403 = vadd.f32 %v1066, %v1402
      %v1404 = vpop.f32.mrb[0].mxu0
      %1405 = vmatprep.mubr.f32.mxu0 0.0
      %1406 = vmatmul.mubr.f32.gmra.mrb[0].mxu0 %v1118
      %v1407 = vpop.f32.mrb[0].mxu0
      %v1408 = vadd.f32 %v1066, %v1407
      %v1409 = vpop.f32.mrb[0].mxu0
      %1410 = vmatprep.mubr.f32.mxu0 0.0
      %1411 = vmatmul.mubr.f32.gmra.mrb[0].mxu0 %v1121
      %v1412 = vpop.f32.mrb[0].mxu0
      %v1413 = vadd.f32 %v1066, %v1412
      %v1414 = vpop.f32.mrb[0].mxu0
      %1415 = vmatprep.mubr.f32.mxu0 0.0
      %1416 = vmatmul.mubr.f32.gmra.mrb[0].mxu0 %v1124
      %v1417 = vpop.f32.mrb[0].mxu0
      %v1418 = vadd.f32 %v1066, %v1417
      %v1419 = vpop.f32.mrb[0].mxu0
      %1420 = vmatprep.mubr.f32.mxu0 0.0
      %1421 = vmatmul.mubr.f32.gmra.mrb[0].mxu0 %v1127
      %v1422 = vpop.f32.mrb[0].mxu0
      %v1423 = vadd.f32 %v1066, %v1422
      %v1424 = vpop.f32.mrb[0].mxu0
      %1425 = vmatprep.mubr.f32.mxu0 0.0
      %1426 = vmatmul.mubr.f32.gmra.mrb[0].mxu0 %v1130
      %v1427 = vpop.f32.mrb[0].mxu0
      %v1428 = vadd.f32 %v1066, %v1427
      %v1429 = vpop.f32.mrb[0].mxu0
      %1430 = vmatprep.mubr.f32.mxu0 0.0
      %1431 = vmatmul.mubr.f32.gmra.mrb[0].mxu0 %v1133
      %v1432 = vpop.f32.mrb[0].mxu0
      %v1433 = vadd.f32 %v1066, %v1432
      %v1434 = vpop.f32.mrb[0].mxu0
      %1435 = vmatprep.mubr.f32.mxu0 0.0
      %1436 = vmatmul.mubr.f32.gmra.mrb[0].mxu0 %v1136
      %v1437 = vpop.f32.mrb[0].mxu0
      %v1438 = vadd.f32 %v1066, %v1437
      %v1439 = vpop.f32.mrb[0].mxu0
      %1440 = vmatprep.mubr.f32.mxu0 0.0
      %1441 = vmatmul.mubr.f32.gmra.mrb[0].mxu0 %v1139
      %v1442 = vpop.f32.mrb[0].mxu0
      %v1443 = vadd.f32 %v1066, %v1442
      %v1444 = vpop.f32.mrb[0].mxu0
      %1445 = vmatprep.mubr.f32.mxu0 0.0
      %1446 = vmatmul.mubr.f32.gmra.mrb[0].mxu0 %v1142
      %v1447 = vpop.f32.mrb[0].mxu0
      %v1448 = vadd.f32 %v1066, %v1447
      %v1449 = vpop.f32.mrb[0].mxu0
      %1450 = vmatprep.mubr.f32.mxu0 0.0
      %1451 = vmatmul.mubr.f32.gmra.mrb[0].mxu0 %v1145
      %v1452 = vpop.f32.mrb[0].mxu0
      %v1453 = vadd.f32 %v1066, %v1452
      %v1454 = vpop.f32.mrb[0].mxu0
      %1455 = vmatprep.mubr.f32.mxu0 0.0
      %1456 = vmatmul.mubr.f32.gmra.mrb[0].mxu0 %v1148
      %v1457 = vpop.f32.mrb[0].mxu0
      %v1458 = vadd.f32 %v1066, %v1457
      %v1459 = vpop.f32.mrb[0].mxu0
      %1460 = vmatprep.mubr.f32.mxu0 0.0
      %1461 = vmatmul.mubr.f32.gmra.mrb[0].mxu0 %v1151
      %v1462 = vpop.f32.mrb[0].mxu0
      %v1463 = vadd.f32 %v1066, %v1462
      %v1464 = vpop.f32.mrb[0].mxu0
      %1465 = vmatprep.mubr.f32.mxu0 0.0
      %1466 = vmatmul.mubr.f32.gmra.mrb[0].mxu0 %v1154
      %v1467 = vpop.f32.mrb[0].mxu0
      %v1468 = vadd.f32 %v1066, %v1467
      %v1469 = vpop.f32.mrb[0].mxu0
      %1470 = vmatprep.mubr.f32.mxu0 0.0
      %1471 = vmatmul.mubr.f32.gmra.mrb[0].mxu0 %v1157
      %v1472 = vpop.f32.mrb[0].mxu0
      %v1473 = vadd.f32 %v1066, %v1472
      %v1474 = vpop.f32.mrb[0].mxu0
      %1475 = vmatprep.mubr.f32.mxu0 0.0
      %1476 = vmatmul.mubr.f32.gmra.mrb[0].mxu0 %v1160
      %v1477 = vpop.f32.mrb[0].mxu0
      %v1478 = vadd.f32 %v1066, %v1477
      %v1479 = vpop.f32.mrb[0].mxu0
      %1480 = vmatprep.mubr.f32.mxu0 0.0
      %1481 = vmatmul.mubr.f32.gmra.mrb[0].mxu0 %v1163
      %v1482 = vpop.f32.mrb[0].mxu0
      %v1483 = vadd.f32 %v1066, %v1482
      %v1484 = vpop.f32.mrb[0].mxu0
      %1485 = vmatprep.mubr.f32.mxu0 0.0
      %1486 = vmatmul.mubr.f32.gmra.mrb[0].mxu0 %v1166
      %v1487 = vpop.f32.mrb[0].mxu0
      %v1488 = vadd.f32 %v1066, %v1487
      %v1489 = vpop.f32.mrb[0].mxu0
      %1490 = vmatprep.mubr.f32.mxu0 0.0
      %1491 = vmatmul.mubr.f32.gmra.mrb[0].mxu0 %v1169
      %v1492 = vpop.f32.mrb[0].mxu0
      %v1493 = vadd.f32 %v1066, %v1492
      %v1494 = vpop.f32.mrb[0].mxu0
      %1495 = vmatprep.mubr.f32.mxu0 0.0
      %1496 = vmatmul.mubr.f32.gmra.mrb[0].mxu0 %v1172
      %v1497 = vpop.f32.mrb[0].mxu0
      %v1498 = vadd.f32 %v1066, %v1497
      %v1499 = vpop.f32.mrb[0].mxu0
      %1500 = vmatprep.mubr.f32.mxu0 0.0
      %1501 = vmatmul.mubr.f32.gmra.mrb[0].mxu0 %v1175
      %v1502 = vpop.f32.mrb[0].mxu0
      %v1503 = vadd.f32 %v1066, %v1502
      %v1504 = vpop.f32.mrb[0].mxu0
      %1505 = vmatprep.mubr.f32.mxu0 0.0
      %1506 = vmatmul.mubr.f32.gmra.mrb[0].mxu0 %v1178
      %v1507 = vpop.f32.mrb[0].mxu0
      %v1508 = vadd.f32 %v1066, %v1507
      %v1509 = vpop.f32.mrb[0].mxu0
      %1510 = vmatprep.mubr.f32.mxu0 0.0
      %1511 = vmatmul.mubr.f32.gmra.mrb[0].mxu0 %v1181
      %v1512 = vpop.f32.mrb[0].mxu0
      %v1513 = vadd.f32 %v1066, %v1512
      %v1514 = vpop.f32.mrb[0].mxu0
      %1515 = vmatprep.mubr.f32.mxu0 0.0
      %1516 = vmatmul.mubr.f32.gmra.mrb[0].mxu0 %v1184
      %v1517 = vpop.f32.mrb[0].mxu0
      %v1518 = vadd.f32 %v1066, %v1517
      %v1519 = vpop.f32.mrb[0].mxu0
      %1520 = vmatprep.mubr.f32.mxu0 0.0
      %1521 = vmatmul.mubr.f32.gmra.mrb[0].mxu0 %v1187
      %v1522 = vpop.f32.mrb[0].mxu0
      %v1523 = vadd.f32 %v1066, %v1522
      %v1524 = vpop.f32.mrb[0].mxu0
      %1525 = vmatprep.mubr.f32.mxu0 0.0
      %1526 = vmatmul.mubr.f32.gmra.mrb[0].mxu0 %v1190
      %v1527 = vpop.f32.mrb[0].mxu0
      %v1528 = vadd.f32 %v1066, %v1527
      %v1529 = vpop.f32.mrb[0].mxu0
      %1530 = vmatprep.mubr.f32.mxu0 0.0
      %1531 = vmatmul.mubr.f32.gmra.mrb[0].mxu0 %v1193
      %v1532 = vpop.f32.mrb[0].mxu0
      %v1533 = vadd.f32 %v1066, %v1532
      %v1534 = vpop.f32.mrb[0].mxu0
      %1535 = vmatprep.mubr.f32.mxu0 0.0
      %1536 = vmatmul.mubr.f32.gmra.mrb[0].mxu0 %v1196
      %v1537 = vpop.f32.mrb[0].mxu0
      %v1538 = vadd.f32 %v1066, %v1537
      %v1539 = vpop.f32.mrb[0].mxu0
      %1540 = vmatprep.mubr.f32.mxu0 0.0
      %1541 = vmatmul.mubr.f32.gmra.mrb[0].mxu0 %v1199
      %v1542 = vpop.f32.mrb[0].mxu0
      %v1543 = vadd.f32 %v1066, %v1542
      %v1544 = vpop.f32.mrb[0].mxu0
      %1545 = vmatprep.mubr.f32.mxu0 0.0
      %1546 = vmatmul.mubr.f32.gmra.mrb[0].mxu0 %v1202
      %v1547 = vpop.f32.mrb[0].mxu0
      %v1548 = vadd.f32 %v1066, %v1547
      %v1549 = vpop.f32.mrb[0].mxu0
      %1550 = vmatprep.mubr.f32.mxu0 0.0
      %1551 = vmatmul.mubr.f32.gmra.mrb[0].mxu0 %v1205
      %v1552 = vpop.f32.mrb[0].mxu0
      %v1553 = vadd.f32 %v1066, %v1552
      %v1554 = vpop.f32.mrb[0].mxu0
      %1555 = vmatprep.mubr.f32.mxu0 0.0
      %1556 = vmatmul.mubr.f32.gmra.mrb[0].mxu0 %v1208
      %v1557 = vpop.f32.mrb[0].mxu0
      %v1558 = vadd.f32 %v1066, %v1557
      %v1559 = vpop.f32.mrb[0].mxu0
      %1560 = vmatprep.mubr.f32.mxu0 0.0
      %1561 = vmatmul.mubr.f32.gmra.mrb[0].mxu0 %v1211
      %v1562 = vpop.f32.mrb[0].mxu0
      %v1563 = vadd.f32 %v1066, %v1562
      %v1564 = vpop.f32.mrb[0].mxu0
      %1565 = vmatprep.mubr.f32.mxu0 0.0
      %1566 = vmatmul.mubr.f32.gmra.mrb[0].mxu0 %v1214
      %v1567 = vpop.f32.mrb[0].mxu0
      %v1568 = vadd.f32 %v1066, %v1567
      %v1569 = vpop.f32.mrb[0].mxu0
      %1570 = vmatprep.mubr.f32.mxu0 0.0
      %1571 = vmatmul.mubr.f32.gmra.mrb[0].mxu0 %v1217
      %v1572 = vpop.f32.mrb[0].mxu0
      %v1573 = vadd.f32 %v1066, %v1572
      %v1574 = vpop.f32.mrb[0].mxu0
      %1575 = vmatprep.mubr.f32.mxu0 0.0
      %1576 = vmatmul.mubr.f32.gmra.mrb[0].mxu0 %v1220
      %v1577 = vpop.f32.mrb[0].mxu0
      %v1578 = vadd.f32 %v1066, %v1577
      %v1579 = vpop.f32.mrb[0].mxu0
      %1580 = vmatprep.mubr.f32.mxu0 0.0
      %1581 = vmatmul.mubr.f32.gmra.mrb[0].mxu0 %v1223
      %v1582 = vpop.f32.mrb[0].mxu0
      %v1583 = vadd.f32 %v1066, %v1582
      %v1584 = vpop.f32.mrb[0].mxu0
      %1585 = vmatprep.mubr.f32.mxu0 0.0
      %1586 = vmatmul.mubr.f32.gmra.mrb[0].mxu0 %v1226
      %v1587 = vpop.f32.mrb[0].mxu0
      %v1588 = vadd.f32 %v1066, %v1587
      %v1589 = vpop.f32.mrb[0].mxu0
      %1590 = vmatprep.mubr.f32.mxu0 0.0
      %1591 = vmatmul.mubr.f32.gmra.mrb[0].mxu0 %v1229
      %v1592 = vpop.f32.mrb[0].mxu0
      %v1593 = vadd.f32 %v1066, %v1592
      %v1594 = vpop.f32.mrb[0].mxu0
      %1595 = vmatprep.mubr.f32.mxu0 0.0
      %1596 = vmatmul.mubr.f32.gmra.mrb[0].mxu0 %v1232
      %v1597 = vpop.f32.mrb[0].mxu0
      %v1598 = vadd.f32 %v1066, %v1597
      %v1599 = vpop.f32.mrb[0].mxu0
      %1600 = vmatprep.mubr.f32.mxu0 0.0
      %1601 = vmatmul.mubr.f32.gmra.mrb[0].mxu0 %v1235
      %v1602 = vpop.f32.mrb[0].mxu0
      %v1603 = vadd.f32 %v1066, %v1602
      %v1604 = vpop.f32.mrb[0].mxu0
      %1605 = vmatprep.mubr.f32.mxu0 0.0
      %1606 = vmatmul.mubr.f32.gmra.mrb[0].mxu0 %v1238
      %v1607 = vpop.f32.mrb[0].mxu0
      %v1608 = vadd.f32 %v1066, %v1607
      %v1609 = vpop.f32.mrb[0].mxu0
      %1610 = vmatprep.mubr.f32.mxu0 0.0
      %1611 = vmatmul.mubr.f32.gmra.mrb[0].mxu0 %v1241
      %v1612 = vpop.f32.mrb[0].mxu0
      %v1613 = vadd.f32 %v1066, %v1612
      %v1614 = vpop.f32.mrb[0].mxu0
      %1615 = vmatprep.mubr.f32.mxu0 0.0
      %1616 = vmatmul.mubr.f32.gmra.mrb[0].mxu0 %v1244
      %v1617 = vpop.f32.mrb[0].mxu0
      %v1618 = vadd.f32 %v1066, %v1617
      %v1619 = vpop.f32.mrb[0].mxu0
      %1620 = vmatprep.mubr.f32.mxu0 0.0
      %1621 = vmatmul.mubr.f32.gmra.mrb[0].mxu0 %v1247
      %v1622 = vpop.f32.mrb[0].mxu0
      %v1623 = vadd.f32 %v1066, %v1622
      %v1624 = vpop.f32.mrb[0].mxu0
      %1625 = vmatprep.mubr.f32.mxu0 0.0
      %1626 = vmatmul.mubr.f32.gmra.mrb[0].mxu0 %v1250
      %v1627 = vpop.f32.mrb[0].mxu0
      %v1628 = vadd.f32 %v1066, %v1627
      %v1629 = vpop.f32.mrb[0].mxu0
      %1630 = vmatprep.mubr.f32.mxu0 0.0
      %1631 = vmatmul.mubr.f32.gmra.mrb[0].mxu0 %v1253
      %v1632 = vpop.f32.mrb[0].mxu0
      %v1633 = vadd.f32 %v1066, %v1632
      %v1634 = vpop.f32.mrb[0].mxu0
      %1635 = vmatprep.mubr.f32.mxu0 0.0
      %1636 = vmatmul.mubr.f32.gmra.mrb[0].mxu0 %v1256
      %v1637 = vpop.f32.mrb[0].mxu0
      %v1638 = vadd.f32 %v1066, %v1637
      %v1639 = vpop.f32.mrb[0].mxu0
      %1640 = vmatprep.mubr.f32.mxu0 0.0
      %1641 = vmatmul.mubr.f32.gmra.mrb[0].mxu0 %v1259
      %v1642 = vpop.f32.mrb[0].mxu0
      %v1643 = vadd.f32 %v1066, %v1642
      %v1644 = vpop.f32.mrb[0].mxu0
      %1645 = vdwg.mxu0
      %v1646 = vld [vmem:[%s5] sm:$0xff]
      %v1647 = vld [vmem:[%s5 + $0x8] sm:$0xff]
      %v1648 = vld [vmem:[%s6] sm:$0x1]
      %v1650 = vlaneseq
      %v1651 = vshrl.u32 %v1650, 7
      %v1652 = vsub.s32 0, %v1651
      %v1653 = vrot.slane %v1648, %v1652
      %vm1655 = vcmask 130048
      %v1657 = vsel %vm1655, %v1328, 0
      %v1660 = vsel %vm1655, %v1333, 0
      %v1663 = vsel %vm1655, %v1338, 0
      %v1666 = vsel %vm1655, %v1343, 0
      %v1669 = vsel %vm1655, %v1348, 0
      %v1672 = vsel %vm1655, %v1353, 0
      %v1675 = vsel %vm1655, %v1358, 0
      %v1678 = vsel %vm1655, %v1363, 0
      %v1681 = vsel %vm1655, %v1368, 0
      %v1684 = vsel %vm1655, %v1373, 0
      %v1687 = vsel %vm1655, %v1378, 0
      %v1690 = vsel %vm1655, %v1383, 0
      %v1693 = vsel %vm1655, %v1388, 0
      %v1696 = vsel %vm1655, %v1393, 0
      %v1699 = vsel %vm1655, %v1398, 0
      %v1702 = vsel %vm1655, %v1403, 0
      %v1705 = vsel %vm1655, %v1408, 0
      %v1708 = vsel %vm1655, %v1413, 0
      %v1711 = vsel %vm1655, %v1418, 0
      %v1714 = vsel %vm1655, %v1423, 0
      %v1717 = vsel %vm1655, %v1428, 0
      %v1720 = vsel %vm1655, %v1433, 0
      %v1723 = vsel %vm1655, %v1438, 0
      %v1726 = vsel %vm1655, %v1443, 0
      %v1729 = vsel %vm1655, %v1448, 0
      %v1732 = vsel %vm1655, %v1453, 0
      %v1735 = vsel %vm1655, %v1458, 0
      %v1738 = vsel %vm1655, %v1463, 0
      %v1741 = vsel %vm1655, %v1468, 0
      %v1744 = vsel %vm1655, %v1473, 0
      %v1747 = vsel %vm1655, %v1478, 0
      %v1750 = vsel %vm1655, %v1483, 0
      %v1753 = vsel %vm1655, %v1488, 0
      %v1756 = vsel %vm1655, %v1493, 0
      %v1759 = vsel %vm1655, %v1498, 0
      %v1762 = vsel %vm1655, %v1503, 0
      %v1765 = vsel %vm1655, %v1508, 0
      %v1768 = vsel %vm1655, %v1513, 0
      %v1771 = vsel %vm1655, %v1518, 0
      %v1774 = vsel %vm1655, %v1523, 0
      %v1777 = vsel %vm1655, %v1528, 0
      %v1780 = vsel %vm1655, %v1533, 0
      %v1783 = vsel %vm1655, %v1538, 0
      %v1786 = vsel %vm1655, %v1543, 0
      %v1789 = vsel %vm1655, %v1548, 0
      %v1792 = vsel %vm1655, %v1553, 0
      %v1795 = vsel %vm1655, %v1558, 0
      %v1798 = vsel %vm1655, %v1563, 0
      %v1801 = vsel %vm1655, %v1568, 0
      %v1804 = vsel %vm1655, %v1573, 0
      %v1807 = vsel %vm1655, %v1578, 0
      %v1810 = vsel %vm1655, %v1583, 0
      %v1813 = vsel %vm1655, %v1588, 0
      %v1816 = vsel %vm1655, %v1593, 0
      %v1819 = vsel %vm1655, %v1598, 0
      %v1822 = vsel %vm1655, %v1603, 0
      %v1825 = vsel %vm1655, %v1608, 0
      %v1828 = vsel %vm1655, %v1613, 0
      %v1831 = vsel %vm1655, %v1618, 0
      %v1834 = vsel %vm1655, %v1623, 0
      %v1837 = vsel %vm1655, %v1628, 0
      %v1840 = vsel %vm1655, %v1633, 0
      %v1843 = vsel %vm1655, %v1638, 0
      %v1846 = vsel %vm1655, %v1643, 0
      %1848 = vmatprep.subr.mxu0 0.0
      %1849 = vmatpush1.msra.mxu0 %v1646
      %1850 = vmatprep.subr.mxu0 0.0
      %1851 = vmatpush1.msra.mxu0 %v1647
      %1852 = vmatprep.subr.mxu0 0.0
      %1853 = vmatpush1.msra.mxu0 0.0
      %1854 = vmatprep.subr.mxu0 0.0
      %1855 = vmatpush1.msra.mxu0 0.0
      %1856 = vmatprep.subr.mxu0 0.0
      %1857 = vmatpush1.msra.mxu0 0.0
      %1858 = vmatprep.subr.mxu0 0.0
      %1859 = vmatpush1.msra.mxu0 0.0
      %1860 = vmatprep.subr.mxu0 0.0
      %1861 = vmatpush1.msra.mxu0 0.0
      %1862 = vmatprep.subr.mxu0 0.0
      %1863 = vmatpush1.msra.mxu0 0.0
      %1864 = vmatprep.subr.mxu0 0.0
      %1865 = vmatpush1.msra.mxu0 0.0
      %1866 = vmatprep.subr.mxu0 0.0
      %1867 = vmatpush1.msra.mxu0 0.0
      %1868 = vmatprep.subr.mxu0 0.0
      %1869 = vmatpush1.msra.mxu0 0.0
      %1870 = vmatprep.subr.mxu0 0.0
      %1871 = vmatpush1.msra.mxu0 0.0
      %1872 = vmatprep.subr.mxu0 0.0
      %1873 = vmatpush1.msra.mxu0 0.0
      %1874 = vmatprep.subr.mxu0 0.0
      %1875 = vmatpush1.msra.mxu0 0.0
      %1876 = vmatprep.subr.mxu0 0.0
      %1877 = vmatpush1.msra.mxu0 0.0
      %1878 = vmatprep.subr.mxu0 0.0
      %1879 = vmatpush1.msra.mxu0 0.0
      %1880 = vmatprep.subr.mxu0 0.0
      %1881 = vmatpush1.msra.mxu0 0.0
      %1882 = vmatprep.subr.mxu0 0.0
      %1883 = vmatpush1.msra.mxu0 0.0
      %1884 = vmatprep.subr.mxu0 0.0
      %1885 = vmatpush1.msra.mxu0 0.0
      %1886 = vmatprep.subr.mxu0 0.0
      %1887 = vmatpush1.msra.mxu0 0.0
      %1888 = vmatprep.subr.mxu0 0.0
      %1889 = vmatpush1.msra.mxu0 0.0
      %1890 = vmatprep.subr.mxu0 0.0
      %1891 = vmatpush1.msra.mxu0 0.0
      %1892 = vmatprep.subr.mxu0 0.0
      %1893 = vmatpush1.msra.mxu0 0.0
      %1894 = vmatprep.subr.mxu0 0.0
      %1895 = vmatpush1.msra.mxu0 0.0
      %1896 = vmatprep.subr.mxu0 0.0
      %1897 = vmatpush1.msra.mxu0 0.0
      %1898 = vmatprep.subr.mxu0 0.0
      %1899 = vmatpush1.msra.mxu0 0.0
      %1900 = vmatprep.subr.mxu0 0.0
      %1901 = vmatpush1.msra.mxu0 0.0
      %1902 = vmatprep.subr.mxu0 0.0
      %1903 = vmatpush1.msra.mxu0 0.0
      %1904 = vmatprep.subr.mxu0 0.0
      %1905 = vmatpush1.msra.mxu0 0.0
      %1906 = vmatprep.subr.mxu0 0.0
      %1907 = vmatpush1.msra.mxu0 0.0
      %1908 = vmatprep.subr.mxu0 0.0
      %1909 = vmatpush1.msra.mxu0 0.0
      %1910 = vmatprep.subr.mxu0 0.0
      %1911 = vmatpush1.msra.mxu0 0.0
      %1912 = vmatprep.mubr.f32.mxu0 0.0
      %1913 = vmatmul.mubr.f32.gmra.mrb[0].mxu0 %v1657
      %v1914 = vpop.f32.mrb[0].mxu0
      %v1915 = vadd.f32 %v1653, %v1914
      %v1916 = vpop.f32.mrb[0].mxu0
      %1917 = vmatprep.mubr.f32.mxu0 0.0
      %1918 = vmatmul.mubr.f32.gmra.mrb[0].mxu0 %v1660
      %v1919 = vpop.f32.mrb[0].mxu0
      %v1920 = vadd.f32 %v1653, %v1919
      %v1921 = vpop.f32.mrb[0].mxu0
      %1922 = vmatprep.mubr.f32.mxu0 0.0
      %1923 = vmatmul.mubr.f32.gmra.mrb[0].mxu0 %v1663
      %v1924 = vpop.f32.mrb[0].mxu0
      %v1925 = vadd.f32 %v1653, %v1924
      %v1926 = vpop.f32.mrb[0].mxu0
      %1927 = vmatprep.mubr.f32.mxu0 0.0
      %1928 = vmatmul.mubr.f32.gmra.mrb[0].mxu0 %v1666
      %v1929 = vpop.f32.mrb[0].mxu0
      %v1930 = vadd.f32 %v1653, %v1929
      %v1931 = vpop.f32.mrb[0].mxu0
      %1932 = vmatprep.mubr.f32.mxu0 0.0
      %1933 = vmatmul.mubr.f32.gmra.mrb[0].mxu0 %v1669
      %v1934 = vpop.f32.mrb[0].mxu0
      %v1935 = vadd.f32 %v1653, %v1934
      %v1936 = vpop.f32.mrb[0].mxu0
      %1937 = vmatprep.mubr.f32.mxu0 0.0
      %1938 = vmatmul.mubr.f32.gmra.mrb[0].mxu0 %v1672
      %v1939 = vpop.f32.mrb[0].mxu0
      %v1940 = vadd.f32 %v1653, %v1939
      %v1941 = vpop.f32.mrb[0].mxu0
      %1942 = vmatprep.mubr.f32.mxu0 0.0
      %1943 = vmatmul.mubr.f32.gmra.mrb[0].mxu0 %v1675
      %v1944 = vpop.f32.mrb[0].mxu0
      %v1945 = vadd.f32 %v1653, %v1944
      %v1946 = vpop.f32.mrb[0].mxu0
      %1947 = vmatprep.mubr.f32.mxu0 0.0
      %1948 = vmatmul.mubr.f32.gmra.mrb[0].mxu0 %v1678
      %v1949 = vpop.f32.mrb[0].mxu0
      %v1950 = vadd.f32 %v1653, %v1949
      %v1951 = vpop.f32.mrb[0].mxu0
      %1952 = vmatprep.mubr.f32.mxu0 0.0
      %1953 = vmatmul.mubr.f32.gmra.mrb[0].mxu0 %v1681
      %v1954 = vpop.f32.mrb[0].mxu0
      %v1955 = vadd.f32 %v1653, %v1954
      %v1956 = vpop.f32.mrb[0].mxu0
      %1957 = vmatprep.mubr.f32.mxu0 0.0
      %1958 = vmatmul.mubr.f32.gmra.mrb[0].mxu0 %v1684
      %v1959 = vpop.f32.mrb[0].mxu0
      %v1960 = vadd.f32 %v1653, %v1959
      %v1961 = vpop.f32.mrb[0].mxu0
      %1962 = vmatprep.mubr.f32.mxu0 0.0
      %1963 = vmatmul.mubr.f32.gmra.mrb[0].mxu0 %v1687
      %v1964 = vpop.f32.mrb[0].mxu0
      %v1965 = vadd.f32 %v1653, %v1964
      %v1966 = vpop.f32.mrb[0].mxu0
      %1967 = vmatprep.mubr.f32.mxu0 0.0
      %1968 = vmatmul.mubr.f32.gmra.mrb[0].mxu0 %v1690
      %v1969 = vpop.f32.mrb[0].mxu0
      %v1970 = vadd.f32 %v1653, %v1969
      %v1971 = vpop.f32.mrb[0].mxu0
      %1972 = vmatprep.mubr.f32.mxu0 0.0
      %1973 = vmatmul.mubr.f32.gmra.mrb[0].mxu0 %v1693
      %v1974 = vpop.f32.mrb[0].mxu0
      %v1975 = vadd.f32 %v1653, %v1974
      %v1976 = vpop.f32.mrb[0].mxu0
      %1977 = vmatprep.mubr.f32.mxu0 0.0
      %1978 = vmatmul.mubr.f32.gmra.mrb[0].mxu0 %v1696
      %v1979 = vpop.f32.mrb[0].mxu0
      %v1980 = vadd.f32 %v1653, %v1979
      %v1981 = vpop.f32.mrb[0].mxu0
      %1982 = vmatprep.mubr.f32.mxu0 0.0
      %1983 = vmatmul.mubr.f32.gmra.mrb[0].mxu0 %v1699
      %v1984 = vpop.f32.mrb[0].mxu0
      %v1985 = vadd.f32 %v1653, %v1984
      %v1986 = vpop.f32.mrb[0].mxu0
      %1987 = vmatprep.mubr.f32.mxu0 0.0
      %1988 = vmatmul.mubr.f32.gmra.mrb[0].mxu0 %v1702
      %v1989 = vpop.f32.mrb[0].mxu0
      %v1990 = vadd.f32 %v1653, %v1989
      %v1991 = vpop.f32.mrb[0].mxu0
      %1992 = vmatprep.mubr.f32.mxu0 0.0
      %1993 = vmatmul.mubr.f32.gmra.mrb[0].mxu0 %v1705
      %v1994 = vpop.f32.mrb[0].mxu0
      %v1995 = vadd.f32 %v1653, %v1994
      %v1996 = vpop.f32.mrb[0].mxu0
      %1997 = vmatprep.mubr.f32.mxu0 0.0
      %1998 = vmatmul.mubr.f32.gmra.mrb[0].mxu0 %v1708
      %v1999 = vpop.f32.mrb[0].mxu0
      %v2000 = vadd.f32 %v1653, %v1999
      %v2001 = vpop.f32.mrb[0].mxu0
      %2002 = vmatprep.mubr.f32.mxu0 0.0
      %2003 = vmatmul.mubr.f32.gmra.mrb[0].mxu0 %v1711
      %v2004 = vpop.f32.mrb[0].mxu0
      %v2005 = vadd.f32 %v1653, %v2004
      %v2006 = vpop.f32.mrb[0].mxu0
      %2007 = vmatprep.mubr.f32.mxu0 0.0
      %2008 = vmatmul.mubr.f32.gmra.mrb[0].mxu0 %v1714
      %v2009 = vpop.f32.mrb[0].mxu0
      %v2010 = vadd.f32 %v1653, %v2009
      %v2011 = vpop.f32.mrb[0].mxu0
      %2012 = vmatprep.mubr.f32.mxu0 0.0
      %2013 = vmatmul.mubr.f32.gmra.mrb[0].mxu0 %v1717
      %v2014 = vpop.f32.mrb[0].mxu0
      %v2015 = vadd.f32 %v1653, %v2014
      %v2016 = vpop.f32.mrb[0].mxu0
      %2017 = vmatprep.mubr.f32.mxu0 0.0
      %2018 = vmatmul.mubr.f32.gmra.mrb[0].mxu0 %v1720
      %v2019 = vpop.f32.mrb[0].mxu0
      %v2020 = vadd.f32 %v1653, %v2019
      %v2021 = vpop.f32.mrb[0].mxu0
      %2022 = vmatprep.mubr.f32.mxu0 0.0
      %2023 = vmatmul.mubr.f32.gmra.mrb[0].mxu0 %v1723
      %v2024 = vpop.f32.mrb[0].mxu0
      %v2025 = vadd.f32 %v1653, %v2024
      %v2026 = vpop.f32.mrb[0].mxu0
      %2027 = vmatprep.mubr.f32.mxu0 0.0
      %2028 = vmatmul.mubr.f32.gmra.mrb[0].mxu0 %v1726
      %v2029 = vpop.f32.mrb[0].mxu0
      %v2030 = vadd.f32 %v1653, %v2029
      %v2031 = vpop.f32.mrb[0].mxu0
      %2032 = vmatprep.mubr.f32.mxu0 0.0
      %2033 = vmatmul.mubr.f32.gmra.mrb[0].mxu0 %v1729
      %v2034 = vpop.f32.mrb[0].mxu0
      %v2035 = vadd.f32 %v1653, %v2034
      %v2036 = vpop.f32.mrb[0].mxu0
      %2037 = vmatprep.mubr.f32.mxu0 0.0
      %2038 = vmatmul.mubr.f32.gmra.mrb[0].mxu0 %v1732
      %v2039 = vpop.f32.mrb[0].mxu0
      %v2040 = vadd.f32 %v1653, %v2039
      %v2041 = vpop.f32.mrb[0].mxu0
      %2042 = vmatprep.mubr.f32.mxu0 0.0
      %2043 = vmatmul.mubr.f32.gmra.mrb[0].mxu0 %v1735
      %v2044 = vpop.f32.mrb[0].mxu0
      %v2045 = vadd.f32 %v1653, %v2044
      %v2046 = vpop.f32.mrb[0].mxu0
      %2047 = vmatprep.mubr.f32.mxu0 0.0
      %2048 = vmatmul.mubr.f32.gmra.mrb[0].mxu0 %v1738
      %v2049 = vpop.f32.mrb[0].mxu0
      %v2050 = vadd.f32 %v1653, %v2049
      %v2051 = vpop.f32.mrb[0].mxu0
      %2052 = vmatprep.mubr.f32.mxu0 0.0
      %2053 = vmatmul.mubr.f32.gmra.mrb[0].mxu0 %v1741
      %v2054 = vpop.f32.mrb[0].mxu0
      %v2055 = vadd.f32 %v1653, %v2054
      %v2056 = vpop.f32.mrb[0].mxu0
      %2057 = vmatprep.mubr.f32.mxu0 0.0
      %2058 = vmatmul.mubr.f32.gmra.mrb[0].mxu0 %v1744
      %v2059 = vpop.f32.mrb[0].mxu0
      %v2060 = vadd.f32 %v1653, %v2059
      %v2061 = vpop.f32.mrb[0].mxu0
      %2062 = vmatprep.mubr.f32.mxu0 0.0
      %2063 = vmatmul.mubr.f32.gmra.mrb[0].mxu0 %v1747
      %v2064 = vpop.f32.mrb[0].mxu0
      %v2065 = vadd.f32 %v1653, %v2064
      %v2066 = vpop.f32.mrb[0].mxu0
      %2067 = vmatprep.mubr.f32.mxu0 0.0
      %2068 = vmatmul.mubr.f32.gmra.mrb[0].mxu0 %v1750
      %v2069 = vpop.f32.mrb[0].mxu0
      %v2070 = vadd.f32 %v1653, %v2069
      %v2071 = vpop.f32.mrb[0].mxu0
      %2072 = vmatprep.mubr.f32.mxu0 0.0
      %2073 = vmatmul.mubr.f32.gmra.mrb[0].mxu0 %v1753
      %v2074 = vpop.f32.mrb[0].mxu0
      %v2075 = vadd.f32 %v1653, %v2074
      %v2076 = vpop.f32.mrb[0].mxu0
      %2077 = vmatprep.mubr.f32.mxu0 0.0
      %2078 = vmatmul.mubr.f32.gmra.mrb[0].mxu0 %v1756
      %v2079 = vpop.f32.mrb[0].mxu0
      %v2080 = vadd.f32 %v1653, %v2079
      %v2081 = vpop.f32.mrb[0].mxu0
      %2082 = vmatprep.mubr.f32.mxu0 0.0
      %2083 = vmatmul.mubr.f32.gmra.mrb[0].mxu0 %v1759
      %v2084 = vpop.f32.mrb[0].mxu0
      %v2085 = vadd.f32 %v1653, %v2084
      %v2086 = vpop.f32.mrb[0].mxu0
      %2087 = vmatprep.mubr.f32.mxu0 0.0
      %2088 = vmatmul.mubr.f32.gmra.mrb[0].mxu0 %v1762
      %v2089 = vpop.f32.mrb[0].mxu0
      %v2090 = vadd.f32 %v1653, %v2089
      %v2091 = vpop.f32.mrb[0].mxu0
      %2092 = vmatprep.mubr.f32.mxu0 0.0
      %2093 = vmatmul.mubr.f32.gmra.mrb[0].mxu0 %v1765
      %v2094 = vpop.f32.mrb[0].mxu0
      %v2095 = vadd.f32 %v1653, %v2094
      %v2096 = vpop.f32.mrb[0].mxu0
      %2097 = vmatprep.mubr.f32.mxu0 0.0
      %2098 = vmatmul.mubr.f32.gmra.mrb[0].mxu0 %v1768
      %v2099 = vpop.f32.mrb[0].mxu0
      %v2100 = vadd.f32 %v1653, %v2099
      %v2101 = vpop.f32.mrb[0].mxu0
      %2102 = vmatprep.mubr.f32.mxu0 0.0
      %2103 = vmatmul.mubr.f32.gmra.mrb[0].mxu0 %v1771
      %v2104 = vpop.f32.mrb[0].mxu0
      %v2105 = vadd.f32 %v1653, %v2104
      %v2106 = vpop.f32.mrb[0].mxu0
      %2107 = vmatprep.mubr.f32.mxu0 0.0
      %2108 = vmatmul.mubr.f32.gmra.mrb[0].mxu0 %v1774
      %v2109 = vpop.f32.mrb[0].mxu0
      %v2110 = vadd.f32 %v1653, %v2109
      %v2111 = vpop.f32.mrb[0].mxu0
      %2112 = vmatprep.mubr.f32.mxu0 0.0
      %2113 = vmatmul.mubr.f32.gmra.mrb[0].mxu0 %v1777
      %v2114 = vpop.f32.mrb[0].mxu0
      %v2115 = vadd.f32 %v1653, %v2114
      %v2116 = vpop.f32.mrb[0].mxu0
      %2117 = vmatprep.mubr.f32.mxu0 0.0
      %2118 = vmatmul.mubr.f32.gmra.mrb[0].mxu0 %v1780
      %v2119 = vpop.f32.mrb[0].mxu0
      %v2120 = vadd.f32 %v1653, %v2119
      %v2121 = vpop.f32.mrb[0].mxu0
      %2122 = vmatprep.mubr.f32.mxu0 0.0
      %2123 = vmatmul.mubr.f32.gmra.mrb[0].mxu0 %v1783
      %v2124 = vpop.f32.mrb[0].mxu0
      %v2125 = vadd.f32 %v1653, %v2124
      %v2126 = vpop.f32.mrb[0].mxu0
      %2127 = vmatprep.mubr.f32.mxu0 0.0
      %2128 = vmatmul.mubr.f32.gmra.mrb[0].mxu0 %v1786
      %v2129 = vpop.f32.mrb[0].mxu0
      %v2130 = vadd.f32 %v1653, %v2129
      %v2131 = vpop.f32.mrb[0].mxu0
      %2132 = vmatprep.mubr.f32.mxu0 0.0
      %2133 = vmatmul.mubr.f32.gmra.mrb[0].mxu0 %v1789
      %v2134 = vpop.f32.mrb[0].mxu0
      %v2135 = vadd.f32 %v1653, %v2134
      %v2136 = vpop.f32.mrb[0].mxu0
      %2137 = vmatprep.mubr.f32.mxu0 0.0
      %2138 = vmatmul.mubr.f32.gmra.mrb[0].mxu0 %v1792
      %v2139 = vpop.f32.mrb[0].mxu0
      %v2140 = vadd.f32 %v1653, %v2139
      %v2141 = vpop.f32.mrb[0].mxu0
      %2142 = vmatprep.mubr.f32.mxu0 0.0
      %2143 = vmatmul.mubr.f32.gmra.mrb[0].mxu0 %v1795
      %v2144 = vpop.f32.mrb[0].mxu0
      %v2145 = vadd.f32 %v1653, %v2144
      %v2146 = vpop.f32.mrb[0].mxu0
      %2147 = vmatprep.mubr.f32.mxu0 0.0
      %2148 = vmatmul.mubr.f32.gmra.mrb[0].mxu0 %v1798
      %v2149 = vpop.f32.mrb[0].mxu0
      %v2150 = vadd.f32 %v1653, %v2149
      %v2151 = vpop.f32.mrb[0].mxu0
      %2152 = vmatprep.mubr.f32.mxu0 0.0
      %2153 = vmatmul.mubr.f32.gmra.mrb[0].mxu0 %v1801
      %v2154 = vpop.f32.mrb[0].mxu0
      %v2155 = vadd.f32 %v1653, %v2154
      %v2156 = vpop.f32.mrb[0].mxu0
      %2157 = vmatprep.mubr.f32.mxu0 0.0
      %2158 = vmatmul.mubr.f32.gmra.mrb[0].mxu0 %v1804
      %v2159 = vpop.f32.mrb[0].mxu0
      %v2160 = vadd.f32 %v1653, %v2159
      %v2161 = vpop.f32.mrb[0].mxu0
      %2162 = vmatprep.mubr.f32.mxu0 0.0
      %2163 = vmatmul.mubr.f32.gmra.mrb[0].mxu0 %v1807
      %v2164 = vpop.f32.mrb[0].mxu0
      %v2165 = vadd.f32 %v1653, %v2164
      %v2166 = vpop.f32.mrb[0].mxu0
      %2167 = vmatprep.mubr.f32.mxu0 0.0
      %2168 = vmatmul.mubr.f32.gmra.mrb[0].mxu0 %v1810
      %v2169 = vpop.f32.mrb[0].mxu0
      %v2170 = vadd.f32 %v1653, %v2169
      %v2171 = vpop.f32.mrb[0].mxu0
      %2172 = vmatprep.mubr.f32.mxu0 0.0
      %2173 = vmatmul.mubr.f32.gmra.mrb[0].mxu0 %v1813
      %v2174 = vpop.f32.mrb[0].mxu0
      %v2175 = vadd.f32 %v1653, %v2174
      %v2176 = vpop.f32.mrb[0].mxu0
      %2177 = vmatprep.mubr.f32.mxu0 0.0
      %2178 = vmatmul.mubr.f32.gmra.mrb[0].mxu0 %v1816
      %v2179 = vpop.f32.mrb[0].mxu0
      %v2180 = vadd.f32 %v1653, %v2179
      %v2181 = vpop.f32.mrb[0].mxu0
      %2182 = vmatprep.mubr.f32.mxu0 0.0
      %2183 = vmatmul.mubr.f32.gmra.mrb[0].mxu0 %v1819
      %v2184 = vpop.f32.mrb[0].mxu0
      %v2185 = vadd.f32 %v1653, %v2184
      %v2186 = vpop.f32.mrb[0].mxu0
      %2187 = vmatprep.mubr.f32.mxu0 0.0
      %2188 = vmatmul.mubr.f32.gmra.mrb[0].mxu0 %v1822
      %v2189 = vpop.f32.mrb[0].mxu0
      %v2190 = vadd.f32 %v1653, %v2189
      %v2191 = vpop.f32.mrb[0].mxu0
      %2192 = vmatprep.mubr.f32.mxu0 0.0
      %2193 = vmatmul.mubr.f32.gmra.mrb[0].mxu0 %v1825
      %v2194 = vpop.f32.mrb[0].mxu0
      %v2195 = vadd.f32 %v1653, %v2194
      %v2196 = vpop.f32.mrb[0].mxu0
      %2197 = vmatprep.mubr.f32.mxu0 0.0
      %2198 = vmatmul.mubr.f32.gmra.mrb[0].mxu0 %v1828
      %v2199 = vpop.f32.mrb[0].mxu0
      %v2200 = vadd.f32 %v1653, %v2199
      %v2201 = vpop.f32.mrb[0].mxu0
      %2202 = vmatprep.mubr.f32.mxu0 0.0
      %2203 = vmatmul.mubr.f32.gmra.mrb[0].mxu0 %v1831
      %v2204 = vpop.f32.mrb[0].mxu0
      %v2205 = vadd.f32 %v1653, %v2204
      %v2206 = vpop.f32.mrb[0].mxu0
      %2207 = vmatprep.mubr.f32.mxu0 0.0
      %2208 = vmatmul.mubr.f32.gmra.mrb[0].mxu0 %v1834
      %v2209 = vpop.f32.mrb[0].mxu0
      %v2210 = vadd.f32 %v1653, %v2209
      %v2211 = vpop.f32.mrb[0].mxu0
      %2212 = vmatprep.mubr.f32.mxu0 0.0
      %2213 = vmatmul.mubr.f32.gmra.mrb[0].mxu0 %v1837
      %v2214 = vpop.f32.mrb[0].mxu0
      %v2215 = vadd.f32 %v1653, %v2214
      %v2216 = vpop.f32.mrb[0].mxu0
      %2217 = vmatprep.mubr.f32.mxu0 0.0
      %2218 = vmatmul.mubr.f32.gmra.mrb[0].mxu0 %v1840
      %v2219 = vpop.f32.mrb[0].mxu0
      %v2220 = vadd.f32 %v1653, %v2219
      %v2221 = vpop.f32.mrb[0].mxu0
      %2222 = vmatprep.mubr.f32.mxu0 0.0
      %2223 = vmatmul.mubr.f32.gmra.mrb[0].mxu0 %v1843
      %v2224 = vpop.f32.mrb[0].mxu0
      %v2225 = vadd.f32 %v1653, %v2224
      %v2226 = vpop.f32.mrb[0].mxu0
      %2227 = vmatprep.mubr.f32.mxu0 0.0
      %2228 = vmatmul.mubr.f32.gmra.mrb[0].mxu0 %v1846
      %v2229 = vpop.f32.mrb[0].mxu0
      %v2230 = vadd.f32 %v1653, %v2229
      %v2231 = vpop.f32.mrb[0].mxu0
      %2232 = vdwg.mxu0
      %v2233 = vmax.f32 %v1915, 0.0
      %v2234 = vmax.f32 %v1920, 0.0
      %v2235 = vmax.f32 %v1925, 0.0
      %v2236 = vmax.f32 %v1930, 0.0
      %v2237 = vmax.f32 %v1935, 0.0
      %v2238 = vmax.f32 %v1940, 0.0
      %v2239 = vmax.f32 %v1945, 0.0
      %v2240 = vmax.f32 %v1950, 0.0
      %v2241 = vmax.f32 %v1955, 0.0
      %v2242 = vmax.f32 %v1960, 0.0
      %v2243 = vmax.f32 %v1965, 0.0
      %v2244 = vmax.f32 %v1970, 0.0
      %v2245 = vmax.f32 %v1975, 0.0
      %v2246 = vmax.f32 %v1980, 0.0
      %v2247 = vmax.f32 %v1985, 0.0
      %v2248 = vmax.f32 %v1990, 0.0
      %v2249 = vmax.f32 %v1995, 0.0
      %v2250 = vmax.f32 %v2000, 0.0
      %v2251 = vmax.f32 %v2005, 0.0
      %v2252 = vmax.f32 %v2010, 0.0
      %v2253 = vmax.f32 %v2015, 0.0
      %v2254 = vmax.f32 %v2020, 0.0
      %v2255 = vmax.f32 %v2025, 0.0
      %v2256 = vmax.f32 %v2030, 0.0
      %v2257 = vmax.f32 %v2035, 0.0
      %v2258 = vmax.f32 %v2040, 0.0
      %v2259 = vmax.f32 %v2045, 0.0
      %v2260 = vmax.f32 %v2050, 0.0
      %v2261 = vmax.f32 %v2055, 0.0
      %v2262 = vmax.f32 %v2060, 0.0
      %v2263 = vmax.f32 %v2065, 0.0
      %v2264 = vmax.f32 %v2070, 0.0
      %v2265 = vmax.f32 %v2075, 0.0
      %v2266 = vmax.f32 %v2080, 0.0
      %v2267 = vmax.f32 %v2085, 0.0
      %v2268 = vmax.f32 %v2090, 0.0
      %v2269 = vmax.f32 %v2095, 0.0
      %v2270 = vmax.f32 %v2100, 0.0
      %v2271 = vmax.f32 %v2105, 0.0
      %v2272 = vmax.f32 %v2110, 0.0
      %v2273 = vmax.f32 %v2115, 0.0
      %v2274 = vmax.f32 %v2120, 0.0
      %v2275 = vmax.f32 %v2125, 0.0
      %v2276 = vmax.f32 %v2130, 0.0
      %v2277 = vmax.f32 %v2135, 0.0
      %v2278 = vmax.f32 %v2140, 0.0
      %v2279 = vmax.f32 %v2145, 0.0
      %v2280 = vmax.f32 %v2150, 0.0
      %v2281 = vmax.f32 %v2155, 0.0
      %v2282 = vmax.f32 %v2160, 0.0
      %v2283 = vmax.f32 %v2165, 0.0
      %v2284 = vmax.f32 %v2170, 0.0
      %v2285 = vmax.f32 %v2175, 0.0
      %v2286 = vmax.f32 %v2180, 0.0
      %v2287 = vmax.f32 %v2185, 0.0
      %v2288 = vmax.f32 %v2190, 0.0
      %v2289 = vmax.f32 %v2195, 0.0
      %v2290 = vmax.f32 %v2200, 0.0
      %v2291 = vmax.f32 %v2205, 0.0
      %v2292 = vmax.f32 %v2210, 0.0
      %v2293 = vmax.f32 %v2215, 0.0
      %v2294 = vmax.f32 %v2220, 0.0
      %v2295 = vmax.f32 %v2225, 0.0
      %v2296 = vmax.f32 %v2230, 0.0
      %v2297 = vld [vmem:[%s7] sm:$0xff]
      %v2298 = vld [vmem:[%s7 + $0x8] sm:$0xff]
      %v2299 = vld [vmem:[%s7 + $0x10] sm:$0xff]
      %v2300 = vld [vmem:[%s7 + $0x18] sm:$0xff]
      %v2301 = vld [vmem:[%s8] sm:$0x1]
      %v2303 = vlaneseq
      %v2304 = vshrl.u32 %v2303, 7
      %v2305 = vsub.s32 0, %v2304
      %v2306 = vrot.slane %v2301, %v2305
      %v2309 = vsel %vm1068, %v2233, 0
      %v2312 = vsel %vm1068, %v2234, 0
      %v2315 = vsel %vm1068, %v2235, 0
      %v2318 = vsel %vm1068, %v2236, 0
      %v2321 = vsel %vm1068, %v2237, 0
      %v2324 = vsel %vm1068, %v2238, 0
      %v2327 = vsel %vm1068, %v2239, 0
      %v2330 = vsel %vm1068, %v2240, 0
      %v2333 = vsel %vm1068, %v2241, 0
      %v2336 = vsel %vm1068, %v2242, 0
      %v2339 = vsel %vm1068, %v2243, 0
      %v2342 = vsel %vm1068, %v2244, 0
      %v2345 = vsel %vm1068, %v2245, 0
      %v2348 = vsel %vm1068, %v2246, 0
      %v2351 = vsel %vm1068, %v2247, 0
      %v2354 = vsel %vm1068, %v2248, 0
      %v2357 = vsel %vm1068, %v2249, 0
      %v2360 = vsel %vm1068, %v2250, 0
      %v2363 = vsel %vm1068, %v2251, 0
      %v2366 = vsel %vm1068, %v2252, 0
      %v2369 = vsel %vm1068, %v2253, 0
      %v2372 = vsel %vm1068, %v2254, 0
      %v2375 = vsel %vm1068, %v2255, 0
      %v2378 = vsel %vm1068, %v2256, 0
      %v2381 = vsel %vm1068, %v2257, 0
      %v2384 = vsel %vm1068, %v2258, 0
      %v2387 = vsel %vm1068, %v2259, 0
      %v2390 = vsel %vm1068, %v2260, 0
      %v2393 = vsel %vm1068, %v2261, 0
      %v2396 = vsel %vm1068, %v2262, 0
      %v2399 = vsel %vm1068, %v2263, 0
      %v2402 = vsel %vm1068, %v2264, 0
      %v2405 = vsel %vm1068, %v2265, 0
      %v2408 = vsel %vm1068, %v2266, 0
      %v2411 = vsel %vm1068, %v2267, 0
      %v2414 = vsel %vm1068, %v2268, 0
      %v2417 = vsel %vm1068, %v2269, 0
      %v2420 = vsel %vm1068, %v2270, 0
      %v2423 = vsel %vm1068, %v2271, 0
      %v2426 = vsel %vm1068, %v2272, 0
      %v2429 = vsel %vm1068, %v2273, 0
      %v2432 = vsel %vm1068, %v2274, 0
      %v2435 = vsel %vm1068, %v2275, 0
      %v2438 = vsel %vm1068, %v2276, 0
      %v2441 = vsel %vm1068, %v2277, 0
      %v2444 = vsel %vm1068, %v2278, 0
      %v2447 = vsel %vm1068, %v2279, 0
      %v2450 = vsel %vm1068, %v2280, 0
      %v2453 = vsel %vm1068, %v2281, 0
      %v2456 = vsel %vm1068, %v2282, 0
      %v2459 = vsel %vm1068, %v2283, 0
      %v2462 = vsel %vm1068, %v2284, 0
      %v2465 = vsel %vm1068, %v2285, 0
      %v2468 = vsel %vm1068, %v2286, 0
      %v2471 = vsel %vm1068, %v2287, 0
      %v2474 = vsel %vm1068, %v2288, 0
      %v2477 = vsel %vm1068, %v2289, 0
      %v2480 = vsel %vm1068, %v2290, 0
      %v2483 = vsel %vm1068, %v2291, 0
      %v2486 = vsel %vm1068, %v2292, 0
      %v2489 = vsel %vm1068, %v2293, 0
      %v2492 = vsel %vm1068, %v2294, 0
      %v2495 = vsel %vm1068, %v2295, 0
      %v2498 = vsel %vm1068, %v2296, 0
      %2500 = vmatprep.subr.mxu0 0.0
      %2501 = vmatpush1.msra.mxu0 %v2297
      %2502 = vmatprep.subr.mxu0 0.0
      %2503 = vmatpush1.msra.mxu0 %v2298
      %2504 = vmatprep.subr.mxu0 0.0
      %2505 = vmatpush1.msra.mxu0 %v2299
      %2506 = vmatprep.subr.mxu0 0.0
      %2507 = vmatpush1.msra.mxu0 %v2300
      %2508 = vmatprep.subr.mxu0 0.0
      %2509 = vmatpush1.msra.mxu0 0.0
      %2510 = vmatprep.subr.mxu0 0.0
      %2511 = vmatpush1.msra.mxu0 0.0
      %2512 = vmatprep.subr.mxu0 0.0
      %2513 = vmatpush1.msra.mxu0 0.0
      %2514 = vmatprep.subr.mxu0 0.0
      %2515 = vmatpush1.msra.mxu0 0.0
      %2516 = vmatprep.subr.mxu0 0.0
      %2517 = vmatpush1.msra.mxu0 0.0
      %2518 = vmatprep.subr.mxu0 0.0
      %2519 = vmatpush1.msra.mxu0 0.0
      %2520 = vmatprep.subr.mxu0 0.0
      %2521 = vmatpush1.msra.mxu0 0.0
      %2522 = vmatprep.subr.mxu0 0.0
      %2523 = vmatpush1.msra.mxu0 0.0
      %2524 = vmatprep.subr.mxu0 0.0
      %2525 = vmatpush1.msra.mxu0 0.0
      %2526 = vmatprep.subr.mxu0 0.0
      %2527 = vmatpush1.msra.mxu0 0.0
      %2528 = vmatprep.subr.mxu0 0.0
      %2529 = vmatpush1.msra.mxu0 0.0
      %2530 = vmatprep.subr.mxu0 0.0
      %2531 = vmatpush1.msra.mxu0 0.0
      %2532 = vmatprep.subr.mxu0 0.0
      %2533 = vmatpush1.msra.mxu0 0.0
      %2534 = vmatprep.subr.mxu0 0.0
      %2535 = vmatpush1.msra.mxu0 0.0
      %2536 = vmatprep.subr.mxu0 0.0
      %2537 = vmatpush1.msra.mxu0 0.0
      %2538 = vmatprep.subr.mxu0 0.0
      %2539 = vmatpush1.msra.mxu0 0.0
      %2540 = vmatprep.subr.mxu0 0.0
      %2541 = vmatpush1.msra.mxu0 0.0
      %2542 = vmatprep.subr.mxu0 0.0
      %2543 = vmatpush1.msra.mxu0 0.0
      %2544 = vmatprep.subr.mxu0 0.0
      %2545 = vmatpush1.msra.mxu0 0.0
      %2546 = vmatprep.subr.mxu0 0.0
      %2547 = vmatpush1.msra.mxu0 0.0
      %2548 = vmatprep.subr.mxu0 0.0
      %2549 = vmatpush1.msra.mxu0 0.0
      %2550 = vmatprep.subr.mxu0 0.0
      %2551 = vmatpush1.msra.mxu0 0.0
      %2552 = vmatprep.subr.mxu0 0.0
      %2553 = vmatpush1.msra.mxu0 0.0
      %2554 = vmatprep.subr.mxu0 0.0
      %2555 = vmatpush1.msra.mxu0 0.0
      %2556 = vmatprep.subr.mxu0 0.0
      %2557 = vmatpush1.msra.mxu0 0.0
      %2558 = vmatprep.subr.mxu0 0.0
      %2559 = vmatpush1.msra.mxu0 0.0
      %2560 = vmatprep.subr.mxu0 0.0
      %2561 = vmatpush1.msra.mxu0 0.0
      %2562 = vmatprep.subr.mxu0 0.0
      %2563 = vmatpush1.msra.mxu0 0.0
      %2564 = vmatprep.mubr.f32.mxu0 0.0
      %2565 = vmatmul.mubr.f32.gmra.mrb[0].mxu0 %v2309
      %v2566 = vpop.f32.mrb[0].mxu0
      %v2567 = vadd.f32 %v2306, %v2566
      %v2568 = vpop.f32.mrb[0].mxu0
      %2569 = vmatprep.mubr.f32.mxu0 0.0
      %2570 = vmatmul.mubr.f32.gmra.mrb[0].mxu0 %v2312
      %v2571 = vpop.f32.mrb[0].mxu0
      %v2572 = vadd.f32 %v2306, %v2571
      %v2573 = vpop.f32.mrb[0].mxu0
      %2574 = vmatprep.mubr.f32.mxu0 0.0
      %2575 = vmatmul.mubr.f32.gmra.mrb[0].mxu0 %v2315
      %v2576 = vpop.f32.mrb[0].mxu0
      %v2577 = vadd.f32 %v2306, %v2576
      %v2578 = vpop.f32.mrb[0].mxu0
      %2579 = vmatprep.mubr.f32.mxu0 0.0
      %2580 = vmatmul.mubr.f32.gmra.mrb[0].mxu0 %v2318
      %v2581 = vpop.f32.mrb[0].mxu0
      %v2582 = vadd.f32 %v2306, %v2581
      %v2583 = vpop.f32.mrb[0].mxu0
      %2584 = vmatprep.mubr.f32.mxu0 0.0
      %2585 = vmatmul.mubr.f32.gmra.mrb[0].mxu0 %v2321
      %v2586 = vpop.f32.mrb[0].mxu0
      %v2587 = vadd.f32 %v2306, %v2586
      %v2588 = vpop.f32.mrb[0].mxu0
      %2589 = vmatprep.mubr.f32.mxu0 0.0
      %2590 = vmatmul.mubr.f32.gmra.mrb[0].mxu0 %v2324
      %v2591 = vpop.f32.mrb[0].mxu0
      %v2592 = vadd.f32 %v2306, %v2591
      %v2593 = vpop.f32.mrb[0].mxu0
      %2594 = vmatprep.mubr.f32.mxu0 0.0
      %2595 = vmatmul.mubr.f32.gmra.mrb[0].mxu0 %v2327
      %v2596 = vpop.f32.mrb[0].mxu0
      %v2597 = vadd.f32 %v2306, %v2596
      %v2598 = vpop.f32.mrb[0].mxu0
      %2599 = vmatprep.mubr.f32.mxu0 0.0
      %2600 = vmatmul.mubr.f32.gmra.mrb[0].mxu0 %v2330
      %v2601 = vpop.f32.mrb[0].mxu0
      %v2602 = vadd.f32 %v2306, %v2601
      %v2603 = vpop.f32.mrb[0].mxu0
      %2604 = vmatprep.mubr.f32.mxu0 0.0
      %2605 = vmatmul.mubr.f32.gmra.mrb[0].mxu0 %v2333
      %v2606 = vpop.f32.mrb[0].mxu0
      %v2607 = vadd.f32 %v2306, %v2606
      %v2608 = vpop.f32.mrb[0].mxu0
      %2609 = vmatprep.mubr.f32.mxu0 0.0
      %2610 = vmatmul.mubr.f32.gmra.mrb[0].mxu0 %v2336
      %v2611 = vpop.f32.mrb[0].mxu0
      %v2612 = vadd.f32 %v2306, %v2611
      %v2613 = vpop.f32.mrb[0].mxu0
      %2614 = vmatprep.mubr.f32.mxu0 0.0
      %2615 = vmatmul.mubr.f32.gmra.mrb[0].mxu0 %v2339
      %v2616 = vpop.f32.mrb[0].mxu0
      %v2617 = vadd.f32 %v2306, %v2616
      %v2618 = vpop.f32.mrb[0].mxu0
      %2619 = vmatprep.mubr.f32.mxu0 0.0
      %2620 = vmatmul.mubr.f32.gmra.mrb[0].mxu0 %v2342
      %v2621 = vpop.f32.mrb[0].mxu0
      %v2622 = vadd.f32 %v2306, %v2621
      %v2623 = vpop.f32.mrb[0].mxu0
      %2624 = vmatprep.mubr.f32.mxu0 0.0
      %2625 = vmatmul.mubr.f32.gmra.mrb[0].mxu0 %v2345
      %v2626 = vpop.f32.mrb[0].mxu0
      %v2627 = vadd.f32 %v2306, %v2626
      %v2628 = vpop.f32.mrb[0].mxu0
      %2629 = vmatprep.mubr.f32.mxu0 0.0
      %2630 = vmatmul.mubr.f32.gmra.mrb[0].mxu0 %v2348
      %v2631 = vpop.f32.mrb[0].mxu0
      %v2632 = vadd.f32 %v2306, %v2631
      %v2633 = vpop.f32.mrb[0].mxu0
      %2634 = vmatprep.mubr.f32.mxu0 0.0
      %2635 = vmatmul.mubr.f32.gmra.mrb[0].mxu0 %v2351
      %v2636 = vpop.f32.mrb[0].mxu0
      %v2637 = vadd.f32 %v2306, %v2636
      %v2638 = vpop.f32.mrb[0].mxu0
      %2639 = vmatprep.mubr.f32.mxu0 0.0
      %2640 = vmatmul.mubr.f32.gmra.mrb[0].mxu0 %v2354
      %v2641 = vpop.f32.mrb[0].mxu0
      %v2642 = vadd.f32 %v2306, %v2641
      %v2643 = vpop.f32.mrb[0].mxu0
      %2644 = vmatprep.mubr.f32.mxu0 0.0
      %2645 = vmatmul.mubr.f32.gmra.mrb[0].mxu0 %v2357
      %v2646 = vpop.f32.mrb[0].mxu0
      %v2647 = vadd.f32 %v2306, %v2646
      %v2648 = vpop.f32.mrb[0].mxu0
      %2649 = vmatprep.mubr.f32.mxu0 0.0
      %2650 = vmatmul.mubr.f32.gmra.mrb[0].mxu0 %v2360
      %v2651 = vpop.f32.mrb[0].mxu0
      %v2652 = vadd.f32 %v2306, %v2651
      %v2653 = vpop.f32.mrb[0].mxu0
      %2654 = vmatprep.mubr.f32.mxu0 0.0
      %2655 = vmatmul.mubr.f32.gmra.mrb[0].mxu0 %v2363
      %v2656 = vpop.f32.mrb[0].mxu0
      %v2657 = vadd.f32 %v2306, %v2656
      %v2658 = vpop.f32.mrb[0].mxu0
      %2659 = vmatprep.mubr.f32.mxu0 0.0
      %2660 = vmatmul.mubr.f32.gmra.mrb[0].mxu0 %v2366
      %v2661 = vpop.f32.mrb[0].mxu0
      %v2662 = vadd.f32 %v2306, %v2661
      %v2663 = vpop.f32.mrb[0].mxu0
      %2664 = vmatprep.mubr.f32.mxu0 0.0
      %2665 = vmatmul.mubr.f32.gmra.mrb[0].mxu0 %v2369
      %v2666 = vpop.f32.mrb[0].mxu0
      %v2667 = vadd.f32 %v2306, %v2666
      %v2668 = vpop.f32.mrb[0].mxu0
      %2669 = vmatprep.mubr.f32.mxu0 0.0
      %2670 = vmatmul.mubr.f32.gmra.mrb[0].mxu0 %v2372
      %v2671 = vpop.f32.mrb[0].mxu0
      %v2672 = vadd.f32 %v2306, %v2671
      %v2673 = vpop.f32.mrb[0].mxu0
      %2674 = vmatprep.mubr.f32.mxu0 0.0
      %2675 = vmatmul.mubr.f32.gmra.mrb[0].mxu0 %v2375
      %v2676 = vpop.f32.mrb[0].mxu0
      %v2677 = vadd.f32 %v2306, %v2676
      %v2678 = vpop.f32.mrb[0].mxu0
      %2679 = vmatprep.mubr.f32.mxu0 0.0
      %2680 = vmatmul.mubr.f32.gmra.mrb[0].mxu0 %v2378
      %v2681 = vpop.f32.mrb[0].mxu0
      %v2682 = vadd.f32 %v2306, %v2681
      %v2683 = vpop.f32.mrb[0].mxu0
      %2684 = vmatprep.mubr.f32.mxu0 0.0
      %2685 = vmatmul.mubr.f32.gmra.mrb[0].mxu0 %v2381
      %v2686 = vpop.f32.mrb[0].mxu0
      %v2687 = vadd.f32 %v2306, %v2686
      %v2688 = vpop.f32.mrb[0].mxu0
      %2689 = vmatprep.mubr.f32.mxu0 0.0
      %2690 = vmatmul.mubr.f32.gmra.mrb[0].mxu0 %v2384
      %v2691 = vpop.f32.mrb[0].mxu0
      %v2692 = vadd.f32 %v2306, %v2691
      %v2693 = vpop.f32.mrb[0].mxu0
      %2694 = vmatprep.mubr.f32.mxu0 0.0
      %2695 = vmatmul.mubr.f32.gmra.mrb[0].mxu0 %v2387
      %v2696 = vpop.f32.mrb[0].mxu0
      %v2697 = vadd.f32 %v2306, %v2696
      %v2698 = vpop.f32.mrb[0].mxu0
      %2699 = vmatprep.mubr.f32.mxu0 0.0
      %2700 = vmatmul.mubr.f32.gmra.mrb[0].mxu0 %v2390
      %v2701 = vpop.f32.mrb[0].mxu0
      %v2702 = vadd.f32 %v2306, %v2701
      %v2703 = vpop.f32.mrb[0].mxu0
      %2704 = vmatprep.mubr.f32.mxu0 0.0
      %2705 = vmatmul.mubr.f32.gmra.mrb[0].mxu0 %v2393
      %v2706 = vpop.f32.mrb[0].mxu0
      %v2707 = vadd.f32 %v2306, %v2706
      %v2708 = vpop.f32.mrb[0].mxu0
      %2709 = vmatprep.mubr.f32.mxu0 0.0
      %2710 = vmatmul.mubr.f32.gmra.mrb[0].mxu0 %v2396
      %v2711 = vpop.f32.mrb[0].mxu0
      %v2712 = vadd.f32 %v2306, %v2711
      %v2713 = vpop.f32.mrb[0].mxu0
      %2714 = vmatprep.mubr.f32.mxu0 0.0
      %2715 = vmatmul.mubr.f32.gmra.mrb[0].mxu0 %v2399
      %v2716 = vpop.f32.mrb[0].mxu0
      %v2717 = vadd.f32 %v2306, %v2716
      %v2718 = vpop.f32.mrb[0].mxu0
      %2719 = vmatprep.mubr.f32.mxu0 0.0
      %2720 = vmatmul.mubr.f32.gmra.mrb[0].mxu0 %v2402
      %v2721 = vpop.f32.mrb[0].mxu0
      %v2722 = vadd.f32 %v2306, %v2721
      %v2723 = vpop.f32.mrb[0].mxu0
      %2724 = vmatprep.mubr.f32.mxu0 0.0
      %2725 = vmatmul.mubr.f32.gmra.mrb[0].mxu0 %v2405
      %v2726 = vpop.f32.mrb[0].mxu0
      %v2727 = vadd.f32 %v2306, %v2726
      %v2728 = vpop.f32.mrb[0].mxu0
      %2729 = vmatprep.mubr.f32.mxu0 0.0
      %2730 = vmatmul.mubr.f32.gmra.mrb[0].mxu0 %v2408
      %v2731 = vpop.f32.mrb[0].mxu0
      %v2732 = vadd.f32 %v2306, %v2731
      %v2733 = vpop.f32.mrb[0].mxu0
      %2734 = vmatprep.mubr.f32.mxu0 0.0
      %2735 = vmatmul.mubr.f32.gmra.mrb[0].mxu0 %v2411
      %v2736 = vpop.f32.mrb[0].mxu0
      %v2737 = vadd.f32 %v2306, %v2736
      %v2738 = vpop.f32.mrb[0].mxu0
      %2739 = vmatprep.mubr.f32.mxu0 0.0
      %2740 = vmatmul.mubr.f32.gmra.mrb[0].mxu0 %v2414
      %v2741 = vpop.f32.mrb[0].mxu0
      %v2742 = vadd.f32 %v2306, %v2741
      %v2743 = vpop.f32.mrb[0].mxu0
      %2744 = vmatprep.mubr.f32.mxu0 0.0
      %2745 = vmatmul.mubr.f32.gmra.mrb[0].mxu0 %v2417
      %v2746 = vpop.f32.mrb[0].mxu0
      %v2747 = vadd.f32 %v2306, %v2746
      %v2748 = vpop.f32.mrb[0].mxu0
      %2749 = vmatprep.mubr.f32.mxu0 0.0
      %2750 = vmatmul.mubr.f32.gmra.mrb[0].mxu0 %v2420
      %v2751 = vpop.f32.mrb[0].mxu0
      %v2752 = vadd.f32 %v2306, %v2751
      %v2753 = vpop.f32.mrb[0].mxu0
      %2754 = vmatprep.mubr.f32.mxu0 0.0
      %2755 = vmatmul.mubr.f32.gmra.mrb[0].mxu0 %v2423
      %v2756 = vpop.f32.mrb[0].mxu0
      %v2757 = vadd.f32 %v2306, %v2756
      %v2758 = vpop.f32.mrb[0].mxu0
      %2759 = vmatprep.mubr.f32.mxu0 0.0
      %2760 = vmatmul.mubr.f32.gmra.mrb[0].mxu0 %v2426
      %v2761 = vpop.f32.mrb[0].mxu0
      %v2762 = vadd.f32 %v2306, %v2761
      %v2763 = vpop.f32.mrb[0].mxu0
      %2764 = vmatprep.mubr.f32.mxu0 0.0
      %2765 = vmatmul.mubr.f32.gmra.mrb[0].mxu0 %v2429
      %v2766 = vpop.f32.mrb[0].mxu0
      %v2767 = vadd.f32 %v2306, %v2766
      %v2768 = vpop.f32.mrb[0].mxu0
      %2769 = vmatprep.mubr.f32.mxu0 0.0
      %2770 = vmatmul.mubr.f32.gmra.mrb[0].mxu0 %v2432
      %v2771 = vpop.f32.mrb[0].mxu0
      %v2772 = vadd.f32 %v2306, %v2771
      %v2773 = vpop.f32.mrb[0].mxu0
      %2774 = vmatprep.mubr.f32.mxu0 0.0
      %2775 = vmatmul.mubr.f32.gmra.mrb[0].mxu0 %v2435
      %v2776 = vpop.f32.mrb[0].mxu0
      %v2777 = vadd.f32 %v2306, %v2776
      %v2778 = vpop.f32.mrb[0].mxu0
      %2779 = vmatprep.mubr.f32.mxu0 0.0
      %2780 = vmatmul.mubr.f32.gmra.mrb[0].mxu0 %v2438
      %v2781 = vpop.f32.mrb[0].mxu0
      %v2782 = vadd.f32 %v2306, %v2781
      %v2783 = vpop.f32.mrb[0].mxu0
      %2784 = vmatprep.mubr.f32.mxu0 0.0
      %2785 = vmatmul.mubr.f32.gmra.mrb[0].mxu0 %v2441
      %v2786 = vpop.f32.mrb[0].mxu0
      %v2787 = vadd.f32 %v2306, %v2786
      %v2788 = vpop.f32.mrb[0].mxu0
      %2789 = vmatprep.mubr.f32.mxu0 0.0
      %2790 = vmatmul.mubr.f32.gmra.mrb[0].mxu0 %v2444
      %v2791 = vpop.f32.mrb[0].mxu0
      %v2792 = vadd.f32 %v2306, %v2791
      %v2793 = vpop.f32.mrb[0].mxu0
      %2794 = vmatprep.mubr.f32.mxu0 0.0
      %2795 = vmatmul.mubr.f32.gmra.mrb[0].mxu0 %v2447
      %v2796 = vpop.f32.mrb[0].mxu0
      %v2797 = vadd.f32 %v2306, %v2796
      %v2798 = vpop.f32.mrb[0].mxu0
      %2799 = vmatprep.mubr.f32.mxu0 0.0
      %2800 = vmatmul.mubr.f32.gmra.mrb[0].mxu0 %v2450
      %v2801 = vpop.f32.mrb[0].mxu0
      %v2802 = vadd.f32 %v2306, %v2801
      %v2803 = vpop.f32.mrb[0].mxu0
      %2804 = vmatprep.mubr.f32.mxu0 0.0
      %2805 = vmatmul.mubr.f32.gmra.mrb[0].mxu0 %v2453
      %v2806 = vpop.f32.mrb[0].mxu0
      %v2807 = vadd.f32 %v2306, %v2806
      %v2808 = vpop.f32.mrb[0].mxu0
      %2809 = vmatprep.mubr.f32.mxu0 0.0
      %2810 = vmatmul.mubr.f32.gmra.mrb[0].mxu0 %v2456
      %v2811 = vpop.f32.mrb[0].mxu0
      %v2812 = vadd.f32 %v2306, %v2811
      %v2813 = vpop.f32.mrb[0].mxu0
      %2814 = vmatprep.mubr.f32.mxu0 0.0
      %2815 = vmatmul.mubr.f32.gmra.mrb[0].mxu0 %v2459
      %v2816 = vpop.f32.mrb[0].mxu0
      %v2817 = vadd.f32 %v2306, %v2816
      %v2818 = vpop.f32.mrb[0].mxu0
      %2819 = vmatprep.mubr.f32.mxu0 0.0
      %2820 = vmatmul.mubr.f32.gmra.mrb[0].mxu0 %v2462
      %v2821 = vpop.f32.mrb[0].mxu0
      %v2822 = vadd.f32 %v2306, %v2821
      %v2823 = vpop.f32.mrb[0].mxu0
      %2824 = vmatprep.mubr.f32.mxu0 0.0
      %2825 = vmatmul.mubr.f32.gmra.mrb[0].mxu0 %v2465
      %v2826 = vpop.f32.mrb[0].mxu0
      %v2827 = vadd.f32 %v2306, %v2826
      %v2828 = vpop.f32.mrb[0].mxu0
      %2829 = vmatprep.mubr.f32.mxu0 0.0
      %2830 = vmatmul.mubr.f32.gmra.mrb[0].mxu0 %v2468
      %v2831 = vpop.f32.mrb[0].mxu0
      %v2832 = vadd.f32 %v2306, %v2831
      %v2833 = vpop.f32.mrb[0].mxu0
      %2834 = vmatprep.mubr.f32.mxu0 0.0
      %2835 = vmatmul.mubr.f32.gmra.mrb[0].mxu0 %v2471
      %v2836 = vpop.f32.mrb[0].mxu0
      %v2837 = vadd.f32 %v2306, %v2836
      %v2838 = vpop.f32.mrb[0].mxu0
      %2839 = vmatprep.mubr.f32.mxu0 0.0
      %2840 = vmatmul.mubr.f32.gmra.mrb[0].mxu0 %v2474
      %v2841 = vpop.f32.mrb[0].mxu0
      %v2842 = vadd.f32 %v2306, %v2841
      %v2843 = vpop.f32.mrb[0].mxu0
      %2844 = vmatprep.mubr.f32.mxu0 0.0
      %2845 = vmatmul.mubr.f32.gmra.mrb[0].mxu0 %v2477
      %v2846 = vpop.f32.mrb[0].mxu0
      %v2847 = vadd.f32 %v2306, %v2846
      %v2848 = vpop.f32.mrb[0].mxu0
      %2849 = vmatprep.mubr.f32.mxu0 0.0
      %2850 = vmatmul.mubr.f32.gmra.mrb[0].mxu0 %v2480
      %v2851 = vpop.f32.mrb[0].mxu0
      %v2852 = vadd.f32 %v2306, %v2851
      %v2853 = vpop.f32.mrb[0].mxu0
      %2854 = vmatprep.mubr.f32.mxu0 0.0
      %2855 = vmatmul.mubr.f32.gmra.mrb[0].mxu0 %v2483
      %v2856 = vpop.f32.mrb[0].mxu0
      %v2857 = vadd.f32 %v2306, %v2856
      %v2858 = vpop.f32.mrb[0].mxu0
      %2859 = vmatprep.mubr.f32.mxu0 0.0
      %2860 = vmatmul.mubr.f32.gmra.mrb[0].mxu0 %v2486
      %v2861 = vpop.f32.mrb[0].mxu0
      %v2862 = vadd.f32 %v2306, %v2861
      %v2863 = vpop.f32.mrb[0].mxu0
      %2864 = vmatprep.mubr.f32.mxu0 0.0
      %2865 = vmatmul.mubr.f32.gmra.mrb[0].mxu0 %v2489
      %v2866 = vpop.f32.mrb[0].mxu0
      %v2867 = vadd.f32 %v2306, %v2866
      %v2868 = vpop.f32.mrb[0].mxu0
      %2869 = vmatprep.mubr.f32.mxu0 0.0
      %2870 = vmatmul.mubr.f32.gmra.mrb[0].mxu0 %v2492
      %v2871 = vpop.f32.mrb[0].mxu0
      %v2872 = vadd.f32 %v2306, %v2871
      %v2873 = vpop.f32.mrb[0].mxu0
      %2874 = vmatprep.mubr.f32.mxu0 0.0
      %2875 = vmatmul.mubr.f32.gmra.mrb[0].mxu0 %v2495
      %v2876 = vpop.f32.mrb[0].mxu0
      %v2877 = vadd.f32 %v2306, %v2876
      %v2878 = vpop.f32.mrb[0].mxu0
      %2879 = vmatprep.mubr.f32.mxu0 0.0
      %2880 = vmatmul.mubr.f32.gmra.mrb[0].mxu0 %v2498
      %v2881 = vpop.f32.mrb[0].mxu0
      %v2882 = vadd.f32 %v2306, %v2881
      %v2883 = vpop.f32.mrb[0].mxu0
      %2884 = vdwg.mxu0
      %v2885 = vxor.u32 %v2567, 2147483648
      %v2886 = vxor.u32 %v2572, 2147483648
      %v2887 = vxor.u32 %v2577, 2147483648
      %v2888 = vxor.u32 %v2582, 2147483648
      %v2889 = vxor.u32 %v2587, 2147483648
      %v2890 = vxor.u32 %v2592, 2147483648
      %v2891 = vxor.u32 %v2597, 2147483648
      %v2892 = vxor.u32 %v2602, 2147483648
      %v2893 = vxor.u32 %v2607, 2147483648
      %v2894 = vxor.u32 %v2612, 2147483648
      %v2895 = vxor.u32 %v2617, 2147483648
      %v2896 = vxor.u32 %v2622, 2147483648
      %v2897 = vxor.u32 %v2627, 2147483648
      %v2898 = vxor.u32 %v2632, 2147483648
      %v2899 = vxor.u32 %v2637, 2147483648
      %v2900 = vxor.u32 %v2642, 2147483648
      %v2901 = vxor.u32 %v2647, 2147483648
      %v2902 = vxor.u32 %v2652, 2147483648
      %v2903 = vxor.u32 %v2657, 2147483648
      %v2904 = vxor.u32 %v2662, 2147483648
      %v2905 = vxor.u32 %v2667, 2147483648
      %v2906 = vxor.u32 %v2672, 2147483648
      %v2907 = vxor.u32 %v2677, 2147483648
      %v2908 = vxor.u32 %v2682, 2147483648
      %v2909 = vxor.u32 %v2687, 2147483648
      %v2910 = vxor.u32 %v2692, 2147483648
      %v2911 = vxor.u32 %v2697, 2147483648
      %v2912 = vxor.u32 %v2702, 2147483648
      %v2913 = vxor.u32 %v2707, 2147483648
      %v2914 = vxor.u32 %v2712, 2147483648
      %v2915 = vxor.u32 %v2717, 2147483648
      %v2916 = vxor.u32 %v2722, 2147483648
      %v2917 = vxor.u32 %v2727, 2147483648
      %v2918 = vxor.u32 %v2732, 2147483648
      %v2919 = vxor.u32 %v2737, 2147483648
      %v2920 = vxor.u32 %v2742, 2147483648
      %v2921 = vxor.u32 %v2747, 2147483648
      %v2922 = vxor.u32 %v2752, 2147483648
      %v2923 = vxor.u32 %v2757, 2147483648
      %v2924 = vxor.u32 %v2762, 2147483648
      %v2925 = vxor.u32 %v2767, 2147483648
      %v2926 = vxor.u32 %v2772, 2147483648
      %v2927 = vxor.u32 %v2777, 2147483648
      %v2928 = vxor.u32 %v2782, 2147483648
      %v2929 = vxor.u32 %v2787, 2147483648
      %v2930 = vxor.u32 %v2792, 2147483648
      %v2931 = vxor.u32 %v2797, 2147483648
      %v2932 = vxor.u32 %v2802, 2147483648
      %v2933 = vxor.u32 %v2807, 2147483648
      %v2934 = vxor.u32 %v2812, 2147483648
      %v2935 = vxor.u32 %v2817, 2147483648
      %v2936 = vxor.u32 %v2822, 2147483648
      %v2937 = vxor.u32 %v2827, 2147483648
      %v2938 = vxor.u32 %v2832, 2147483648
      %v2939 = vxor.u32 %v2837, 2147483648
      %v2940 = vxor.u32 %v2842, 2147483648
      %v2941 = vxor.u32 %v2847, 2147483648
      %v2942 = vxor.u32 %v2852, 2147483648
      %v2943 = vxor.u32 %v2857, 2147483648
      %v2944 = vxor.u32 %v2862, 2147483648
      %v2945 = vxor.u32 %v2867, 2147483648
      %v2946 = vxor.u32 %v2872, 2147483648
      %v2947 = vxor.u32 %v2877, 2147483648
      %v2948 = vxor.u32 %v2882, 2147483648
      %v2949 = vmul.f32 %v2885, 1.442695
      %v2950 = vpow.pop %v2949
      %v2951 = vmul.f32 %v2886, 1.442695
      %v2952 = vpow.pop %v2951
      %v2953 = vmul.f32 %v2887, 1.442695
      %v2954 = vpow.pop %v2953
      %v2955 = vmul.f32 %v2888, 1.442695
      %v2956 = vpow.pop %v2955
      %v2957 = vmul.f32 %v2889, 1.442695
      %v2958 = vpow.pop %v2957
      %v2959 = vmul.f32 %v2890, 1.442695
      %v2960 = vpow.pop %v2959
      %v2961 = vmul.f32 %v2891, 1.442695
      %v2962 = vpow.pop %v2961
      %v2963 = vmul.f32 %v2892, 1.442695
      %v2964 = vpow.pop %v2963
      %v2965 = vmul.f32 %v2893, 1.442695
      %v2966 = vpow.pop %v2965
      %v2967 = vmul.f32 %v2894, 1.442695
      %v2968 = vpow.pop %v2967
      %v2969 = vmul.f32 %v2895, 1.442695
      %v2970 = vpow.pop %v2969
      %v2971 = vmul.f32 %v2896, 1.442695
      %v2972 = vpow.pop %v2971
      %v2973 = vmul.f32 %v2897, 1.442695
      %v2974 = vpow.pop %v2973
      %v2975 = vmul.f32 %v2898, 1.442695
      %v2976 = vpow.pop %v2975
      %v2977 = vmul.f32 %v2899, 1.442695
      %v2978 = vpow.pop %v2977
      %v2979 = vmul.f32 %v2900, 1.442695
      %v2980 = vpow.pop %v2979
      %v2981 = vmul.f32 %v2901, 1.442695
      %v2982 = vpow.pop %v2981
      %v2983 = vmul.f32 %v2902, 1.442695
      %v2984 = vpow.pop %v2983
      %v2985 = vmul.f32 %v2903, 1.442695
      %v2986 = vpow.pop %v2985
      %v2987 = vmul.f32 %v2904, 1.442695
      %v2988 = vpow.pop %v2987
      %v2989 = vmul.f32 %v2905, 1.442695
      %v2990 = vpow.pop %v2989
      %v2991 = vmul.f32 %v2906, 1.442695
      %v2992 = vpow.pop %v2991
      %v2993 = vmul.f32 %v2907, 1.442695
      %v2994 = vpow.pop %v2993
      %v2995 = vmul.f32 %v2908, 1.442695
      %v2996 = vpow.pop %v2995
      %v2997 = vmul.f32 %v2909, 1.442695
      %v2998 = vpow.pop %v2997
      %v2999 = vmul.f32 %v2910, 1.442695
      %v3000 = vpow.pop %v2999
      %v3001 = vmul.f32 %v2911, 1.442695
      %v3002 = vpow.pop %v3001
      %v3003 = vmul.f32 %v2912, 1.442695
      %v3004 = vpow.pop %v3003
      %v3005 = vmul.f32 %v2913, 1.442695
      %v3006 = vpow.pop %v3005
      %v3007 = vmul.f32 %v2914, 1.442695
      %v3008 = vpow.pop %v3007
      %v3009 = vmul.f32 %v2915, 1.442695
      %v3010 = vpow.pop %v3009
      %v3011 = vmul.f32 %v2916, 1.442695
      %v3012 = vpow.pop %v3011
      %v3013 = vmul.f32 %v2917, 1.442695
      %v3014 = vpow.pop %v3013
      %v3015 = vmul.f32 %v2918, 1.442695
      %v3016 = vpow.pop %v3015
      %v3017 = vmul.f32 %v2919, 1.442695
      %v3018 = vpow.pop %v3017
      %v3019 = vmul.f32 %v2920, 1.442695
      %v3020 = vpow.pop %v3019
      %v3021 = vmul.f32 %v2921, 1.442695
      %v3022 = vpow.pop %v3021
      %v3023 = vmul.f32 %v2922, 1.442695
      %v3024 = vpow.pop %v3023
      %v3025 = vmul.f32 %v2923, 1.442695
      %v3026 = vpow.pop %v3025
      %v3027 = vmul.f32 %v2924, 1.442695
      %v3028 = vpow.pop %v3027
      %v3029 = vmul.f32 %v2925, 1.442695
      %v3030 = vpow.pop %v3029
      %v3031 = vmul.f32 %v2926, 1.442695
      %v3032 = vpow.pop %v3031
      %v3033 = vmul.f32 %v2927, 1.442695
      %v3034 = vpow.pop %v3033
      %v3035 = vmul.f32 %v2928, 1.442695
      %v3036 = vpow.pop %v3035
      %v3037 = vmul.f32 %v2929, 1.442695
      %v3038 = vpow.pop %v3037
      %v3039 = vmul.f32 %v2930, 1.442695
      %v3040 = vpow.pop %v3039
      %v3041 = vmul.f32 %v2931, 1.442695
      %v3042 = vpow.pop %v3041
      %v3043 = vmul.f32 %v2932, 1.442695
      %v3044 = vpow.pop %v3043
      %v3045 = vmul.f32 %v2933, 1.442695
      %v3046 = vpow.pop %v3045
      %v3047 = vmul.f32 %v2934, 1.442695
      %v3048 = vpow.pop %v3047
      %v3049 = vmul.f32 %v2935, 1.442695
      %v3050 = vpow.pop %v3049
      %v3051 = vmul.f32 %v2936, 1.442695
      %v3052 = vpow.pop %v3051
      %v3053 = vmul.f32 %v2937, 1.442695
      %v3054 = vpow.pop %v3053
      %v3055 = vmul.f32 %v2938, 1.442695
      %v3056 = vpow.pop %v3055
      %v3057 = vmul.f32 %v2939, 1.442695
      %v3058 = vpow.pop %v3057
      %v3059 = vmul.f32 %v2940, 1.442695
      %v3060 = vpow.pop %v3059
      %v3061 = vmul.f32 %v2941, 1.442695
      %v3062 = vpow.pop %v3061
      %v3063 = vmul.f32 %v2942, 1.442695
      %v3064 = vpow.pop %v3063
      %v3065 = vmul.f32 %v2943, 1.442695
      %v3066 = vpow.pop %v3065
      %v3067 = vmul.f32 %v2944, 1.442695
      %v3068 = vpow.pop %v3067
      %v3069 = vmul.f32 %v2945, 1.442695
      %v3070 = vpow.pop %v3069
      %v3071 = vmul.f32 %v2946, 1.442695
      %v3072 = vpow.pop %v3071
      %v3073 = vmul.f32 %v2947, 1.442695
      %v3074 = vpow.pop %v3073
      %v3075 = vmul.f32 %v2948, 1.442695
      %v3076 = vpow.pop %v3075
      %v3077 = vadd.f32 %v2950, 1.0
      %v3078 = vadd.f32 %v2952, 1.0
      %v3079 = vadd.f32 %v2954, 1.0
      %v3080 = vadd.f32 %v2956, 1.0
      %v3081 = vadd.f32 %v2958, 1.0
      %v3082 = vadd.f32 %v2960, 1.0
      %v3083 = vadd.f32 %v2962, 1.0
      %v3084 = vadd.f32 %v2964, 1.0
      %v3085 = vadd.f32 %v2966, 1.0
      %v3086 = vadd.f32 %v2968, 1.0
      %v3087 = vadd.f32 %v2970, 1.0
      %v3088 = vadd.f32 %v2972, 1.0
      %v3089 = vadd.f32 %v2974, 1.0
      %v3090 = vadd.f32 %v2976, 1.0
      %v3091 = vadd.f32 %v2978, 1.0
      %v3092 = vadd.f32 %v2980, 1.0
      %v3093 = vadd.f32 %v2982, 1.0
      %v3094 = vadd.f32 %v2984, 1.0
      %v3095 = vadd.f32 %v2986, 1.0
      %v3096 = vadd.f32 %v2988, 1.0
      %v3097 = vadd.f32 %v2990, 1.0
      %v3098 = vadd.f32 %v2992, 1.0
      %v3099 = vadd.f32 %v2994, 1.0
      %v3100 = vadd.f32 %v2996, 1.0
      %v3101 = vadd.f32 %v2998, 1.0
      %v3102 = vadd.f32 %v3000, 1.0
      %v3103 = vadd.f32 %v3002, 1.0
      %v3104 = vadd.f32 %v3004, 1.0
      %v3105 = vadd.f32 %v3006, 1.0
      %v3106 = vadd.f32 %v3008, 1.0
      %v3107 = vadd.f32 %v3010, 1.0
      %v3108 = vadd.f32 %v3012, 1.0
      %v3109 = vadd.f32 %v3014, 1.0
      %v3110 = vadd.f32 %v3016, 1.0
      %v3111 = vadd.f32 %v3018, 1.0
      %v3112 = vadd.f32 %v3020, 1.0
      %v3113 = vadd.f32 %v3022, 1.0
      %v3114 = vadd.f32 %v3024, 1.0
      %v3115 = vadd.f32 %v3026, 1.0
      %v3116 = vadd.f32 %v3028, 1.0
      %v3117 = vadd.f32 %v3030, 1.0
      %v3118 = vadd.f32 %v3032, 1.0
      %v3119 = vadd.f32 %v3034, 1.0
      %v3120 = vadd.f32 %v3036, 1.0
      %v3121 = vadd.f32 %v3038, 1.0
      %v3122 = vadd.f32 %v3040, 1.0
      %v3123 = vadd.f32 %v3042, 1.0
      %v3124 = vadd.f32 %v3044, 1.0
      %v3125 = vadd.f32 %v3046, 1.0
      %v3126 = vadd.f32 %v3048, 1.0
      %v3127 = vadd.f32 %v3050, 1.0
      %v3128 = vadd.f32 %v3052, 1.0
      %v3129 = vadd.f32 %v3054, 1.0
      %v3130 = vadd.f32 %v3056, 1.0
      %v3131 = vadd.f32 %v3058, 1.0
      %v3132 = vadd.f32 %v3060, 1.0
      %v3133 = vadd.f32 %v3062, 1.0
      %v3134 = vadd.f32 %v3064, 1.0
      %v3135 = vadd.f32 %v3066, 1.0
      %v3136 = vadd.f32 %v3068, 1.0
      %v3137 = vadd.f32 %v3070, 1.0
      %v3138 = vadd.f32 %v3072, 1.0
      %v3139 = vadd.f32 %v3074, 1.0
      %v3140 = vadd.f32 %v3076, 1.0
      %v3141 = vrcp.pop %v3077
      %v3142 = vmul.f32 1.0, %v3141
      %v3143 = vrcp.pop %v3078
      %v3144 = vmul.f32 1.0, %v3143
      %v3145 = vrcp.pop %v3079
      %v3146 = vmul.f32 1.0, %v3145
      %v3147 = vrcp.pop %v3080
      %v3148 = vmul.f32 1.0, %v3147
      %v3149 = vrcp.pop %v3081
      %v3150 = vmul.f32 1.0, %v3149
      %v3151 = vrcp.pop %v3082
      %v3152 = vmul.f32 1.0, %v3151
      %v3153 = vrcp.pop %v3083
      %v3154 = vmul.f32 1.0, %v3153
      %v3155 = vrcp.pop %v3084
      %v3156 = vmul.f32 1.0, %v3155
      %v3157 = vrcp.pop %v3085
      %v3158 = vmul.f32 1.0, %v3157
      %v3159 = vrcp.pop %v3086
      %v3160 = vmul.f32 1.0, %v3159
      %v3161 = vrcp.pop %v3087
      %v3162 = vmul.f32 1.0, %v3161
      %v3163 = vrcp.pop %v3088
      %v3164 = vmul.f32 1.0, %v3163
      %v3165 = vrcp.pop %v3089
      %v3166 = vmul.f32 1.0, %v3165
      %v3167 = vrcp.pop %v3090
      %v3168 = vmul.f32 1.0, %v3167
      %v3169 = vrcp.pop %v3091
      %v3170 = vmul.f32 1.0, %v3169
      %v3171 = vrcp.pop %v3092
      %v3172 = vmul.f32 1.0, %v3171
      %v3173 = vrcp.pop %v3093
      %v3174 = vmul.f32 1.0, %v3173
      %v3175 = vrcp.pop %v3094
      %v3176 = vmul.f32 1.0, %v3175
      %v3177 = vrcp.pop %v3095
      %v3178 = vmul.f32 1.0, %v3177
      %v3179 = vrcp.pop %v3096
      %v3180 = vmul.f32 1.0, %v3179
      %v3181 = vrcp.pop %v3097
      %v3182 = vmul.f32 1.0, %v3181
      %v3183 = vrcp.pop %v3098
      %v3184 = vmul.f32 1.0, %v3183
      %v3185 = vrcp.pop %v3099
      %v3186 = vmul.f32 1.0, %v3185
      %v3187 = vrcp.pop %v3100
      %v3188 = vmul.f32 1.0, %v3187
      %v3189 = vrcp.pop %v3101
      %v3190 = vmul.f32 1.0, %v3189
      %v3191 = vrcp.pop %v3102
      %v3192 = vmul.f32 1.0, %v3191
      %v3193 = vrcp.pop %v3103
      %v3194 = vmul.f32 1.0, %v3193
      %v3195 = vrcp.pop %v3104
      %v3196 = vmul.f32 1.0, %v3195
      %v3197 = vrcp.pop %v3105
      %v3198 = vmul.f32 1.0, %v3197
      %v3199 = vrcp.pop %v3106
      %v3200 = vmul.f32 1.0, %v3199
      %v3201 = vrcp.pop %v3107
      %v3202 = vmul.f32 1.0, %v3201
      %v3203 = vrcp.pop %v3108
      %v3204 = vmul.f32 1.0, %v3203
      %v3205 = vrcp.pop %v3109
      %v3206 = vmul.f32 1.0, %v3205
      %v3207 = vrcp.pop %v3110
      %v3208 = vmul.f32 1.0, %v3207
      %v3209 = vrcp.pop %v3111
      %v3210 = vmul.f32 1.0, %v3209
      %v3211 = vrcp.pop %v3112
      %v3212 = vmul.f32 1.0, %v3211
      %v3213 = vrcp.pop %v3113
      %v3214 = vmul.f32 1.0, %v3213
      %v3215 = vrcp.pop %v3114
      %v3216 = vmul.f32 1.0, %v3215
      %v3217 = vrcp.pop %v3115
      %v3218 = vmul.f32 1.0, %v3217
      %v3219 = vrcp.pop %v3116
      %v3220 = vmul.f32 1.0, %v3219
      %v3221 = vrcp.pop %v3117
      %v3222 = vmul.f32 1.0, %v3221
      %v3223 = vrcp.pop %v3118
      %v3224 = vmul.f32 1.0, %v3223
      %v3225 = vrcp.pop %v3119
      %v3226 = vmul.f32 1.0, %v3225
      %v3227 = vrcp.pop %v3120
      %v3228 = vmul.f32 1.0, %v3227
      %v3229 = vrcp.pop %v3121
      %v3230 = vmul.f32 1.0, %v3229
      %v3231 = vrcp.pop %v3122
      %v3232 = vmul.f32 1.0, %v3231
      %v3233 = vrcp.pop %v3123
      %v3234 = vmul.f32 1.0, %v3233
      %v3235 = vrcp.pop %v3124
      %v3236 = vmul.f32 1.0, %v3235
      %v3237 = vrcp.pop %v3125
      %v3238 = vmul.f32 1.0, %v3237
      %v3239 = vrcp.pop %v3126
      %v3240 = vmul.f32 1.0, %v3239
      %v3241 = vrcp.pop %v3127
      %v3242 = vmul.f32 1.0, %v3241
      %v3243 = vrcp.pop %v3128
      %v3244 = vmul.f32 1.0, %v3243
      %v3245 = vrcp.pop %v3129
      %v3246 = vmul.f32 1.0, %v3245
      %v3247 = vrcp.pop %v3130
      %v3248 = vmul.f32 1.0, %v3247
      %v3249 = vrcp.pop %v3131
      %v3250 = vmul.f32 1.0, %v3249
      %v3251 = vrcp.pop %v3132
      %v3252 = vmul.f32 1.0, %v3251
      %v3253 = vrcp.pop %v3133
      %v3254 = vmul.f32 1.0, %v3253
      %v3255 = vrcp.pop %v3134
      %v3256 = vmul.f32 1.0, %v3255
      %v3257 = vrcp.pop %v3135
      %v3258 = vmul.f32 1.0, %v3257
      %v3259 = vrcp.pop %v3136
      %v3260 = vmul.f32 1.0, %v3259
      %v3261 = vrcp.pop %v3137
      %v3262 = vmul.f32 1.0, %v3261
      %v3263 = vrcp.pop %v3138
      %v3264 = vmul.f32 1.0, %v3263
      %v3265 = vrcp.pop %v3139
      %v3266 = vmul.f32 1.0, %v3265
      %v3267 = vrcp.pop %v3140
      %v3268 = vmul.f32 1.0, %v3267
      %3269 = vst.msk [vmem:[%s334] sm:$0xff] %vm415, %v3142
      %3270 = vst.msk [vmem:[%s334 + $0x8] sm:$0xff] %vm415, %v3144
      %3271 = vst.msk [vmem:[%s334 + $0x10] sm:$0xff] %vm415, %v3146
      %3272 = vst.msk [vmem:[%s334 + $0x18] sm:$0xff] %vm415, %v3148
      %3273 = vst.msk [vmem:[%s334 + $0x20] sm:$0xff] %vm415, %v3150
      %3274 = vst.msk [vmem:[%s334 + $0x28] sm:$0xff] %vm415, %v3152
      %3275 = vst.msk [vmem:[%s334 + $0x30] sm:$0xff] %vm415, %v3154
      %3276 = vst.msk [vmem:[%s334 + $0x38] sm:$0xff] %vm415, %v3156
      %3277 = vst.msk [vmem:[%s334 + $0x40] sm:$0xff] %vm415, %v3158
      %3278 = vst.msk [vmem:[%s334 + $0x48] sm:$0xff] %vm415, %v3160
      %3279 = vst.msk [vmem:[%s334 + $0x50] sm:$0xff] %vm415, %v3162
      %3280 = vst.msk [vmem:[%s334 + $0x58] sm:$0xff] %vm415, %v3164
      %3281 = vst.msk [vmem:[%s334 + $0x60] sm:$0xff] %vm415, %v3166
      %3282 = vst.msk [vmem:[%s334 + $0x68] sm:$0xff] %vm415, %v3168
      %3283 = vst.msk [vmem:[%s334 + $0x70] sm:$0xff] %vm415, %v3170
      %3284 = vst.msk [vmem:[%s334 + $0x78] sm:$0xff] %vm415, %v3172
      %3285 = vst.msk [vmem:[%s334 + $0x80] sm:$0xff] %vm415, %v3174
      %3286 = vst.msk [vmem:[%s334 + $0x88] sm:$0xff] %vm415, %v3176
      %3287 = vst.msk [vmem:[%s334 + $0x90] sm:$0xff] %vm415, %v3178
      %3288 = vst.msk [vmem:[%s334 + $0x98] sm:$0xff] %vm415, %v3180
      %3289 = vst.msk [vmem:[%s334 + $0xa0] sm:$0xff] %vm415, %v3182
      %3290 = vst.msk [vmem:[%s334 + $0xa8] sm:$0xff] %vm415, %v3184
      %3291 = vst.msk [vmem:[%s334 + $0xb0] sm:$0xff] %vm415, %v3186
      %3292 = vst.msk [vmem:[%s334 + $0xb8] sm:$0xff] %vm415, %v3188
      %3293 = vst.msk [vmem:[%s334 + $0xc0] sm:$0xff] %vm415, %v3190
      %3294 = vst.msk [vmem:[%s334 + $0xc8] sm:$0xff] %vm415, %v3192
      %3295 = vst.msk [vmem:[%s334 + $0xd0] sm:$0xff] %vm415, %v3194
      %3296 = vst.msk [vmem:[%s334 + $0xd8] sm:$0xff] %vm415, %v3196
      %3297 = vst.msk [vmem:[%s334 + $0xe0] sm:$0xff] %vm415, %v3198
      %3298 = vst.msk [vmem:[%s334 + $0xe8] sm:$0xff] %vm415, %v3200
      %3299 = vst.msk [vmem:[%s334 + $0xf0] sm:$0xff] %vm415, %v3202
      %3300 = vst.msk [vmem:[%s334 + $0xf8] sm:$0xff] %vm415, %v3204
      %3301 = vst.msk [vmem:[%s334 + $0x100] sm:$0xff] %vm415, %v3206
      %3302 = vst.msk [vmem:[%s334 + $0x108] sm:$0xff] %vm415, %v3208
      %3303 = vst.msk [vmem:[%s334 + $0x110] sm:$0xff] %vm415, %v3210
      %3304 = vst.msk [vmem:[%s334 + $0x118] sm:$0xff] %vm415, %v3212
      %3305 = vst.msk [vmem:[%s334 + $0x120] sm:$0xff] %vm415, %v3214
      %3306 = vst.msk [vmem:[%s334 + $0x128] sm:$0xff] %vm415, %v3216
      %3307 = vst.msk [vmem:[%s334 + $0x130] sm:$0xff] %vm415, %v3218
      %3308 = vst.msk [vmem:[%s334 + $0x138] sm:$0xff] %vm415, %v3220
      %3309 = vst.msk [vmem:[%s334 + $0x140] sm:$0xff] %vm415, %v3222
      %3310 = vst.msk [vmem:[%s334 + $0x148] sm:$0xff] %vm415, %v3224
      %3311 = vst.msk [vmem:[%s334 + $0x150] sm:$0xff] %vm415, %v3226
      %3312 = vst.msk [vmem:[%s334 + $0x158] sm:$0xff] %vm415, %v3228
      %3313 = vst.msk [vmem:[%s334 + $0x160] sm:$0xff] %vm415, %v3230
      %3314 = vst.msk [vmem:[%s334 + $0x168] sm:$0xff] %vm415, %v3232
      %3315 = vst.msk [vmem:[%s334 + $0x170] sm:$0xff] %vm415, %v3234
      %3316 = vst.msk [vmem:[%s334 + $0x178] sm:$0xff] %vm415, %v3236
      %3317 = vst.msk [vmem:[%s334 + $0x180] sm:$0xff] %vm415, %v3238
      %3318 = vst.msk [vmem:[%s334 + $0x188] sm:$0xff] %vm415, %v3240
      %3319 = vst.msk [vmem:[%s334 + $0x190] sm:$0xff] %vm415, %v3242
      %3320 = vst.msk [vmem:[%s334 + $0x198] sm:$0xff] %vm415, %v3244
      %3321 = vst.msk [vmem:[%s334 + $0x1a0] sm:$0xff] %vm415, %v3246
      %3322 = vst.msk [vmem:[%s334 + $0x1a8] sm:$0xff] %vm415, %v3248
      %3323 = vst.msk [vmem:[%s334 + $0x1b0] sm:$0xff] %vm415, %v3250
      %3324 = vst.msk [vmem:[%s334 + $0x1b8] sm:$0xff] %vm415, %v3252
      %3325 = vst.msk [vmem:[%s334 + $0x1c0] sm:$0xff] %vm415, %v3254
      %3326 = vst.msk [vmem:[%s334 + $0x1c8] sm:$0xff] %vm415, %v3256
      %3327 = vst.msk [vmem:[%s334 + $0x1d0] sm:$0xff] %vm415, %v3258
      %3328 = vst.msk [vmem:[%s334 + $0x1d8] sm:$0xff] %vm415, %v3260
      %3329 = vst.msk [vmem:[%s334 + $0x1e0] sm:$0xff] %vm415, %v3262
      %3330 = vst.msk [vmem:[%s334 + $0x1e8] sm:$0xff] %vm415, %v3264
      %3331 = vst.msk [vmem:[%s334 + $0x1f0] sm:$0xff] %vm415, %v3266
      %3332 = vst.msk [vmem:[%s334 + $0x1f8] sm:$0xff] %vm415, %v3268
      %s3333 = smul.u32 64, %s20
      %p3334 = scmp.lt.s32.totalorder %s3333, 127
      %s3335 = scalar_select %p3334, %s3333, 127
      %s3336 = smul.addr %s3335, 8
      %s3337 = scalar_lea.vmem %s9, %s3336
      // Predicated region
      $region57: #{tpu_custom_call.1} parent=55 // pred_check
        %p3338 = pneg %p232
      $region58: #{tpu_custom_call.1} parent=55 // pred_check_branch
        %3340 = sbr.rel (%p3338) target = $region60
      $region59: #{tpu_custom_call.1} parent=55 // pred_region
        %s3341 = smul.u32 64, %s20
      $region60: #{tpu_custom_call.1} parent=55 // pred_fallthru
        _
    $region56: #{tpu_custom_call.1} parent=5 // pred_fallthru
      _
    %p3342 = scmp.le.s32.totalorder 2, %s15
    // Predicated region
    $region61: #{tpu_custom_call.1} parent=5 // pred_check
      %p3343 = pneg %p3342
    $region62: #{tpu_custom_call.1} parent=5 // pred_check_branch
      %3345 = sbr.rel (%p3343) target = $region64
    $region63: #{tpu_custom_call.1} parent=5 // pred_region
      %s3346 = ssub.s32 %s15, 2
      // Predicated region
      $region65: #{tpu_custom_call.1} parent=63 // pred_check
        %p3347 = pneg %p238
      $region66: #{tpu_custom_call.1} parent=63 // pred_check_branch
        %3349 = sbr.rel (%p3347) target = $region68
      $region67: #{tpu_custom_call.1} parent=63 // pred_region
        %s3350 = smul.u32 64, %s21
        %p3351 = scmp.lt.s32.totalorder %s3350, 127
        %s3352 = scalar_select %p3351, %s3350, 127
        %s3353 = smul.addr %s3352, 8
        %s3354 = scalar_lea.vmem %s9, %s3353
      $region68: #{tpu_custom_call.1} parent=63 // pred_fallthru
        _
    $region64: #{tpu_custom_call.1} parent=5 // pred_fallthru
      _
  $region6: #{tpu_custom_call.1} parent=0 // loop_footer
    %s19 = sadd.s32 1, %s15
  $region7: #{tpu_custom_call.1} parent=0 // loop_footer_branch
    %14 = sbr.rel target = $region3
  $region8: #{tpu_custom_call.1} parent=0 // loop_exit
    _

</llo_original>
